<compile_context>
chip_gen: v6e
topology: v6e:2x2x1
jax: 0.10.0
libtpu: 0.0.40
codegen_flags: <defaults>
</compile_context>

<pallas_src>
import jax
import jax.numpy as jnp
from jax.experimental import pallas as pl
from jax.experimental.pallas import tpu as pltpu

IN_FEATURES = 28 * 28          # 784 (= 98 * 8, sublane-aligned)
HIDDEN = 512
OUT_FEATURES = 10
OUT_PAD = 128                  # lane-dense output width
MAX_TILE_M = 512               # rows per grid step (>= 256 fills v6e/v7x MXU rows)


def _round_up(x, m):
    return ((x + m - 1) // m) * m


def _pick_tile_m(n):
    """Rows per grid step: big enough to amortize per-step overhead, but keep
    >=2 grid steps when possible so v7x megacore has work for both cores."""
    n8 = _round_up(n, 8)                      # f32 sublane alignment
    if n8 <= 256:
        return n8                             # tiny batch: one small step
    steps = max(2, _round_up(n8, MAX_TILE_M) // MAX_TILE_M)
    return _round_up(-(-n8 // steps), 8)      # ceil(n8/steps), rounded to 8


def _mlp_kernel(x_ref, w1_ref, b1_ref, w2_ref, b2_ref, w3_ref, b3_ref, o_ref):
    # Three MXU matmuls (bf16 in, f32 accumulation) + VPU ReLU, all in VMEM.
    x = x_ref[...].astype(jnp.bfloat16)                                 # (tile_m, 784)
    h1 = jnp.dot(x, w1_ref[...], preferred_element_type=jnp.float32)
    h1 = jnp.maximum(h1 + b1_ref[...], 0.0).astype(jnp.bfloat16)        # (tile_m, 512)
    h2 = jnp.dot(h1, w2_ref[...], preferred_element_type=jnp.float32)
    h2 = jnp.maximum(h2 + b2_ref[...], 0.0).astype(jnp.bfloat16)        # (tile_m, 512)
    logits = jnp.dot(h2, w3_ref[...], preferred_element_type=jnp.float32)
    o_ref[...] = (logits + b3_ref[...]).astype(o_ref.dtype)             # (tile_m, 128)


@jax.jit
def mlp_forward(x_nchw, w1, b1, w2, b2, w3, b3):
    """x_nchw: (N, 1, 28, 28) float32. Returns logits (N, 10) float32.

    Weights are (in, out) (transposed vs. PyTorch) so the kernel computes
    y = x @ W + b.
    """
    n = x_nchw.shape[0]
    tile_m = _pick_tile_m(n)
    n_pad = _round_up(n, tile_m)

    # --- wrapper-side plumbing: reshape only; no K pad, no cast pass over x ---
    x = x_nchw.reshape(n, IN_FEATURES)                  # metadata-only reshape
    if n_pad != n:
        x = jnp.pad(x, ((0, n_pad - n), (0, 0)))        # batch pad only if needed

    w1b = w1.astype(jnp.bfloat16)                                             # (784, 512)
    w2b = w2.astype(jnp.bfloat16)                                             # (512, 512)
    w3b = jnp.pad(w3, ((0, 0), (0, OUT_PAD - OUT_FEATURES))).astype(jnp.bfloat16)  # (512, 128)
    b1f = b1.astype(jnp.float32)                                              # (1, 512)
    b2f = b2.astype(jnp.float32)                                              # (1, 512)
    b3f = jnp.pad(b3, ((0, 0), (0, OUT_PAD - OUT_FEATURES))).astype(jnp.float32)   # (1, 128)

    grid = (n_pad // tile_m,)

    # x / out tiles advance with the grid; weights & biases stay VMEM-resident.
    x_spec = pl.BlockSpec((tile_m, IN_FEATURES), lambda i: (i, 0))
    out_spec = pl.BlockSpec((tile_m, OUT_PAD), lambda i: (i, 0))
    resident = lambda shape: pl.BlockSpec(shape, lambda i: tuple(0 for _ in shape))

    flops = 2 * n_pad * (IN_FEATURES * HIDDEN + HIDDEN * HIDDEN + HIDDEN * OUT_PAD)
    bytes_accessed = (
        n_pad * IN_FEATURES * 4                            # f32 input tiles
        + (w1b.size + w2b.size + w3b.size) * 2             # bf16 weights
        + (b1f.size + b2f.size + b3f.size) * 4             # f32 biases
        + n_pad * OUT_PAD * 4                              # f32 output
    )

    logits_padded = pl.pallas_call(
        _mlp_kernel,
        out_shape=jax.ShapeDtypeStruct((n_pad, OUT_PAD), jnp.float32),
        grid=grid,
        in_specs=[
            x_spec,                   # x    (n_pad, 784) f32
            resident(w1b.shape),      # w1   (784, 512) bf16
            resident(b1f.shape),      # b1   (1, 512)  f32
            resident(w2b.shape),      # w2   (512, 512) bf16
            resident(b2f.shape),      # b2   (1, 512)  f32
            resident(w3b.shape),      # w3   (512, 128) bf16
            resident(b3f.shape),      # b3   (1, 128)  f32
        ],
        out_specs=out_spec,
        compiler_params=pltpu.CompilerParams(
            dimension_semantics=("parallel",),
        ),
        cost_estimate=pl.CostEstimate(
            flops=flops, transcendentals=0, bytes_accessed=bytes_accessed
        ),
    )(x, w1b, b1f, w2b, b2f, w3b, b3f)

    return logits_padded[:n, :OUT_FEATURES]


def init_params(key):
    """Deterministic init mimicking nn.Linear's U(-1/sqrt(fan_in), +1/sqrt(fan_in))."""
    def linear(k, fan_in, fan_out):
        kw, kb = jax.random.split(k)
        bound = 1.0 / jnp.sqrt(fan_in)
        w = jax.random.uniform(kw, (fan_in, fan_out), jnp.float32, -bound, bound)
        b = jax.random.uniform(kb, (1, fan_out), jnp.float32, -bound, bound)
        return w, b

    k1, k2, k3 = jax.random.split(key, 3)
    w1, b1 = linear(k1, IN_FEATURES, HIDDEN)
    w2, b2 = linear(k2, HIDDEN, HIDDEN)
    w3, b3 = linear(k3, HIDDEN, OUT_FEATURES)
    return w1, b1, w2, b2, w3, b3


if __name__ == "__main__":
    key = jax.random.PRNGKey(0)
    k_params, k_x = jax.random.split(key)

    params = init_params(k_params)
    # Small MNIST-like batch: (batch=8, channels=1, 28, 28)
    x = jax.random.normal(k_x, (8, 1, 28, 28), dtype=jnp.float32)

    logits = mlp_forward(x, *params)
    logits = jax.block_until_ready(logits)

    # Reference in plain JAX mirroring the kernel's bf16-input / f32-accumulate math.
    w1, b1, w2, b2, w3, b3 = params
    xf = x.reshape(x.shape[0], -1).astype(jnp.bfloat16).astype(jnp.float32)
    w1f = w1.astype(jnp.bfloat16).astype(jnp.float32)
    w2f = w2.astype(jnp.bfloat16).astype(jnp.float32)
    w3f = w3.astype(jnp.bfloat16).astype(jnp.float32)
    h1 = jnp.maximum(xf @ w1f + b1, 0.0).astype(jnp.bfloat16).astype(jnp.float32)
    h2 = jnp.maximum(h1 @ w2f + b2, 0.0).astype(jnp.bfloat16).astype(jnp.float32)
    ref = h2 @ w3f + b3

    assert logits.shape == (8, 10)
    assert jnp.allclose(logits, ref, atol=2e-2, rtol=2e-2), (
        float(jnp.max(jnp.abs(logits - ref)))
    )

    print("KERNEL_OK")
</pallas_src>

<mosaic_0001>
module attributes {stable_mosaic.version = 11 : i64} {
  func.func @_mlp_kernel(%arg0: i32, %arg1: memref<8x784xf32, #tpu.memory_space<vmem>>, %arg2: memref<784x512xbf16, #tpu.memory_space<vmem>>, %arg3: memref<1x512xf32, #tpu.memory_space<vmem>>, %arg4: memref<512x512xbf16, #tpu.memory_space<vmem>>, %arg5: memref<1x512xf32, #tpu.memory_space<vmem>>, %arg6: memref<512x128xbf16, #tpu.memory_space<vmem>>, %arg7: memref<1x128xf32, #tpu.memory_space<vmem>>, %arg8: memref<8x128xf32, #tpu.memory_space<vmem>>) attributes {dimension_semantics = [#tpu.dimension_semantics<parallel>], iteration_bounds = array<i64: 1>, scalar_prefetch = 0 : i64, scratch_operands = 0 : i64, tpu.core_type = #tpu.core_type<tc>, window_params = [{transform_indices = @transform_0, window_bounds = array<i64: 8, 784>}, {pipeline_mode = #tpu.pipeline_mode<synchronous>, transform_indices = @transform_1, window_bounds = array<i64: 784, 512>}, {pipeline_mode = #tpu.pipeline_mode<synchronous>, transform_indices = @transform_2, window_bounds = array<i64: 1, 512>}, {pipeline_mode = #tpu.pipeline_mode<synchronous>, transform_indices = @transform_3, window_bounds = array<i64: 512, 512>}, {pipeline_mode = #tpu.pipeline_mode<synchronous>, transform_indices = @transform_4, window_bounds = array<i64: 1, 512>}, {pipeline_mode = #tpu.pipeline_mode<synchronous>, transform_indices = @transform_5, window_bounds = array<i64: 512, 128>}, {pipeline_mode = #tpu.pipeline_mode<synchronous>, transform_indices = @transform_6, window_bounds = array<i64: 1, 128>}, {transform_indices = @transform_7, window_bounds = array<i64: 8, 128>}]} {
    %c0 = arith.constant 0 : index
    %c0_0 = arith.constant 0 : index
    %0 = vector.load %arg1[%c0, %c0_0] : memref<8x784xf32, #tpu.memory_space<vmem>>, vector<8x784xf32>
    %1 = arith.truncf %0 : vector<8x784xf32> to vector<8x784xbf16>
    %c0_1 = arith.constant 0 : index
    %c0_2 = arith.constant 0 : index
    %2 = vector.load %arg2[%c0_1, %c0_2] : memref<784x512xbf16, #tpu.memory_space<vmem>>, vector<784x512xbf16>
    %cst = arith.constant dense<0.000000e+00> : vector<8x512xf32>
    %3 = tpu.matmul %1, %2, %cst {dimension_numbers = #tpu.dot_dimension_numbers<[1], [0], [0], [1], [0, 0, 1, 1], [], []>} : vector<8x784xbf16>, vector<784x512xbf16>, vector<8x512xf32> -> vector<8x512xf32>
    %c0_3 = arith.constant 0 : index
    %c0_4 = arith.constant 0 : index
    %4 = vector.load %arg3[%c0_3, %c0_4] : memref<1x512xf32, #tpu.memory_space<vmem>>, vector<1x512xf32>
    %5 = vector.broadcast %4 : vector<1x512xf32> to vector<8x512xf32>
    %6 = arith.addf %3, %5 : vector<8x512xf32>
    %cst_5 = arith.constant 0.000000e+00 : f32
    %7 = vector.broadcast %cst_5 : f32 to vector<8x512xf32>
    %8 = arith.maximumf %6, %7 : vector<8x512xf32>
    %9 = arith.truncf %8 : vector<8x512xf32> to vector<8x512xbf16>
    %c0_6 = arith.constant 0 : index
    %c0_7 = arith.constant 0 : index
    %10 = vector.load %arg4[%c0_6, %c0_7] : memref<512x512xbf16, #tpu.memory_space<vmem>>, vector<512x512xbf16>
    %cst_8 = arith.constant dense<0.000000e+00> : vector<8x512xf32>
    %11 = tpu.matmul %9, %10, %cst_8 {dimension_numbers = #tpu.dot_dimension_numbers<[1], [0], [0], [1], [0, 0, 1, 1], [], []>} : vector<8x512xbf16>, vector<512x512xbf16>, vector<8x512xf32> -> vector<8x512xf32>
    %c0_9 = arith.constant 0 : index
    %c0_10 = arith.constant 0 : index
    %12 = vector.load %arg5[%c0_9, %c0_10] : memref<1x512xf32, #tpu.memory_space<vmem>>, vector<1x512xf32>
    %13 = vector.broadcast %12 : vector<1x512xf32> to vector<8x512xf32>
    %14 = arith.addf %11, %13 : vector<8x512xf32>
    %cst_11 = arith.constant 0.000000e+00 : f32
    %15 = vector.broadcast %cst_11 : f32 to vector<8x512xf32>
    %16 = arith.maximumf %14, %15 : vector<8x512xf32>
    %17 = arith.truncf %16 : vector<8x512xf32> to vector<8x512xbf16>
    %c0_12 = arith.constant 0 : index
    %c0_13 = arith.constant 0 : index
    %18 = vector.load %arg6[%c0_12, %c0_13] : memref<512x128xbf16, #tpu.memory_space<vmem>>, vector<512x128xbf16>
    %cst_14 = arith.constant dense<0.000000e+00> : vector<8x128xf32>
    %19 = tpu.matmul %17, %18, %cst_14 {dimension_numbers = #tpu.dot_dimension_numbers<[1], [0], [0], [1], [0, 0, 1, 1], [], []>} : vector<8x512xbf16>, vector<512x128xbf16>, vector<8x128xf32> -> vector<8x128xf32>
    %c0_15 = arith.constant 0 : index
    %c0_16 = arith.constant 0 : index
    %20 = vector.load %arg7[%c0_15, %c0_16] : memref<1x128xf32, #tpu.memory_space<vmem>>, vector<1x128xf32>
    %21 = vector.broadcast %20 : vector<1x128xf32> to vector<8x128xf32>
    %22 = arith.addf %19, %21 : vector<8x128xf32>
    %c0_17 = arith.constant 0 : index
    %c0_18 = arith.constant 0 : index
    %23 = vector.load %arg8[%c0_17, %c0_18] : memref<8x128xf32, #tpu.memory_space<vmem>>, vector<8x128xf32>
    tpu.vector_store %arg8[%c0_17, %c0_18], %22 {strides = array<i32>} : memref<8x128xf32, #tpu.memory_space<vmem>>, vector<8x128xf32>,
    return
  }
  func.func @transform_0(%arg0: i32) -> (i32, i32) {
    %c0_i32 = arith.constant 0 : i32
    %c0_i32_0 = arith.constant 0 : i32
    return %arg0, %c0_i32 : i32, i32
  }
  func.func @transform_1(%arg0: i32) -> (i32, i32) {
    %c0_i32 = arith.constant 0 : i32
    %c0_i32_0 = arith.constant 0 : i32
    %c0_i32_1 = arith.constant 0 : i32
    return %c0_i32, %c0_i32_0 : i32, i32
  }
  func.func @transform_2(%arg0: i32) -> (i32, i32) {
    %c0_i32 = arith.constant 0 : i32
    %c0_i32_0 = arith.constant 0 : i32
    %c0_i32_1 = arith.constant 0 : i32
    return %c0_i32, %c0_i32_0 : i32, i32
  }
  func.func @transform_3(%arg0: i32) -> (i32, i32) {
    %c0_i32 = arith.constant 0 : i32
    %c0_i32_0 = arith.constant 0 : i32
    %c0_i32_1 = arith.constant 0 : i32
    return %c0_i32, %c0_i32_0 : i32, i32
  }
  func.func @transform_4(%arg0: i32) -> (i32, i32) {
    %c0_i32 = arith.constant 0 : i32
    %c0_i32_0 = arith.constant 0 : i32
    %c0_i32_1 = arith.constant 0 : i32
    return %c0_i32, %c0_i32_0 : i32, i32
  }
  func.func @transform_5(%arg0: i32) -> (i32, i32) {
    %c0_i32 = arith.constant 0 : i32
    %c0_i32_0 = arith.constant 0 : i32
    %c0_i32_1 = arith.constant 0 : i32
    return %c0_i32, %c0_i32_0 : i32, i32
  }
  func.func @transform_6(%arg0: i32) -> (i32, i32) {
    %c0_i32 = arith.constant 0 : i32
    %c0_i32_0 = arith.constant 0 : i32
    %c0_i32_1 = arith.constant 0 : i32
    return %c0_i32, %c0_i32_0 : i32, i32
  }
  func.func @transform_7(%arg0: i32) -> (i32, i32) {
    %c0_i32 = arith.constant 0 : i32
    %c0_i32_0 = arith.constant 0 : i32
    return %arg0, %c0_i32 : i32, i32
  }
}

</mosaic_0001>

<llo_original>
// kernel: mlp_forward.1
$region0: #{mlp_forward.1}
  #allocation0 [shape = 'u32[]', space=smem, size = 0x4, offset = 0x4, fixed_abs, tag = 'smem constant byte address 0x4 - core index']
  #allocation1 [shape = 'u32[144,128]{1,0:T(1,128)}', space=vmem, size = 0x12000, scoped, tag = 'internal scratch']
  %s0 = inlined_call_operand.vmem [shape: f32[8,784], index: 0, kind: input, shape index: {}]
  %s1 = inlined_call_operand.vmem [shape: bf16[784,512], index: 1, kind: input, shape index: {}]
  %s2 = inlined_call_operand.vmem [shape: f32[1,512], index: 2, kind: input, shape index: {}]
  %s3 = inlined_call_operand.vmem [shape: bf16[512,512], index: 3, kind: input, shape index: {}]
  %s4 = inlined_call_operand.vmem [shape: f32[1,512], index: 4, kind: input, shape index: {}]
  %s5 = inlined_call_operand.vmem [shape: bf16[512,128], index: 5, kind: input, shape index: {}]
  %s6 = inlined_call_operand.vmem [shape: f32[1,128], index: 6, kind: input, shape index: {}]
  %s7 = inlined_call_operand.hbm [shape: f32[8,128], index: 7, kind: output, shape index: {}]
  %s8 = sld [smem:[#allocation0]]
  $region38: #{mlp_forward.1} parent=0
    _
  %s10 = ssub.s32 1, %s8
  %s11 = scalar_select 0, %s10, %s8
  $region1: #{mlp_forward.1} parent=0
    #allocation2 [shape = 'u8[4096]{0}', space=vmem, size = 0x1000, scoped, tag = 'output window, operand 0, single buffered']
    #allocation3 [shape = 's32[1]{0}', space=sflag, size = 0x4, scoped, tag = 'scoped memory for mlp_forward.1']
    %12 = vsyncpa [#allocation3], 0
    // Predicated region
    $region2: #{mlp_forward.1} parent=1 // pred_check
      _
    $region3: #{mlp_forward.1} parent=1 // pred_check_branch
      %14 = sbr.rel (0) target = $region5
    $region4: #{mlp_forward.1} parent=1 // pred_region
      _
    $region5: #{mlp_forward.1} parent=1 // pred_fallthru
      _
    // Predicated region
    $region6: #{mlp_forward.1} parent=1 // pred_check
      _
    $region7: #{mlp_forward.1} parent=1 // pred_check_branch
      %16 = sbr.rel (0) target = $region9
    $region8: #{mlp_forward.1} parent=1 // pred_region
      _
    $region9: #{mlp_forward.1} parent=1 // pred_fallthru
      _
    // Predicated region
    $region10: #{mlp_forward.1} parent=1 // pred_check
      _
    $region11: #{mlp_forward.1} parent=1 // pred_check_branch
      %18 = sbr.rel (0) target = $region13
    $region12: #{mlp_forward.1} parent=1 // pred_region
      _
    $region13: #{mlp_forward.1} parent=1 // pred_fallthru
      _
    // Predicated region
    $region14: #{mlp_forward.1} parent=1 // pred_check
      _
    $region15: #{mlp_forward.1} parent=1 // pred_check_branch
      %20 = sbr.rel (0) target = $region17
    $region16: #{mlp_forward.1} parent=1 // pred_region
      _
    $region17: #{mlp_forward.1} parent=1 // pred_fallthru
      _
    // Predicated region
    $region18: #{mlp_forward.1} parent=1 // pred_check
      _
    $region19: #{mlp_forward.1} parent=1 // pred_check_branch
      %22 = sbr.rel (0) target = $region21
    $region20: #{mlp_forward.1} parent=1 // pred_region
      _
    $region21: #{mlp_forward.1} parent=1 // pred_fallthru
      _
    // Predicated region
    $region22: #{mlp_forward.1} parent=1 // pred_check
      _
    $region23: #{mlp_forward.1} parent=1 // pred_check_branch
      %24 = sbr.rel (0) target = $region25
    $region24: #{mlp_forward.1} parent=1 // pred_region
      _
    $region25: #{mlp_forward.1} parent=1 // pred_fallthru
      _
    // Predicated region
    $region26: #{mlp_forward.1} parent=1 // pred_check
      _
    $region27: #{mlp_forward.1} parent=1 // pred_check_branch
      %26 = sbr.rel (0) target = $region29
    $region28: #{mlp_forward.1} parent=1 // pred_region
      _
    $region29: #{mlp_forward.1} parent=1 // pred_fallthru
      _
    %v28 = vld [vmem:[%s0] sm:$0xff]
    %v29 = vld [vmem:[%s0 + $0x8] sm:$0xff]
    %v30 = vld [vmem:[%s0 + $0x10] sm:$0xff]
    %v31 = vld [vmem:[%s0 + $0x18] sm:$0xff]
    %v32 = vld [vmem:[%s0 + $0x20] sm:$0xff]
    %v33 = vld [vmem:[%s0 + $0x28] sm:$0xff]
    %v34 = vld [vmem:[%s0 + $0x30] sm:$0xff]
    %v35 = vpack.c.bf16 %v28, %v28
    %v36 = vpack.c.bf16 %v29, %v29
    %v37 = vpack.c.bf16 %v30, %v30
    %v38 = vpack.c.bf16 %v31, %v31
    %v39 = vpack.c.bf16 %v32, %v32
    %v40 = vpack.c.bf16 %v33, %v33
    %v41 = vpack.c.bf16 %v34, %v34
    %v42 = vld [vmem:[%s1] sm:$0xff]
    %v43 = vld [vmem:[%s1 + $0x8] sm:$0xff]
    %v44 = vld [vmem:[%s1 + $0x10] sm:$0xff]
    %v45 = vld [vmem:[%s1 + $0x18] sm:$0xff]
    %v46 = vld [vmem:[%s1 + $0x20] sm:$0xff]
    %v47 = vld [vmem:[%s1 + $0x28] sm:$0xff]
    %v48 = vld [vmem:[%s1 + $0x30] sm:$0xff]
    %v49 = vld [vmem:[%s1 + $0x38] sm:$0xff]
    %v50 = vld [vmem:[%s1 + $0x40] sm:$0xff]
    %v51 = vld [vmem:[%s1 + $0x48] sm:$0xff]
    %v52 = vld [vmem:[%s1 + $0x50] sm:$0xff]
    %v53 = vld [vmem:[%s1 + $0x58] sm:$0xff]
    %v54 = vld [vmem:[%s1 + $0x60] sm:$0xff]
    %v55 = vld [vmem:[%s1 + $0x68] sm:$0xff]
    %v56 = vld [vmem:[%s1 + $0x70] sm:$0xff]
    %v57 = vld [vmem:[%s1 + $0x78] sm:$0xff]
    %v58 = vld [vmem:[%s1 + $0x80] sm:$0xff]
    %v59 = vld [vmem:[%s1 + $0x88] sm:$0xff]
    %v60 = vld [vmem:[%s1 + $0x90] sm:$0xff]
    %v61 = vld [vmem:[%s1 + $0x98] sm:$0xff]
    %v62 = vld [vmem:[%s1 + $0xa0] sm:$0xff]
    %v63 = vld [vmem:[%s1 + $0xa8] sm:$0xff]
    %v64 = vld [vmem:[%s1 + $0xb0] sm:$0xff]
    %v65 = vld [vmem:[%s1 + $0xb8] sm:$0xff]
    %v66 = vld [vmem:[%s1 + $0xc0] sm:$0xff]
    %v67 = vld [vmem:[%s1 + $0xc8] sm:$0xff]
    %v68 = vld [vmem:[%s1 + $0xd0] sm:$0xff]
    %v69 = vld [vmem:[%s1 + $0xd8] sm:$0xff]
    %v70 = vld [vmem:[%s1 + $0xe0] sm:$0xff]
    %v71 = vld [vmem:[%s1 + $0xe8] sm:$0xff]
    %v72 = vld [vmem:[%s1 + $0xf0] sm:$0xff]
    %v73 = vld [vmem:[%s1 + $0xf8] sm:$0xff]
    %v74 = vld [vmem:[%s1 + $0x100] sm:$0xff]
    %v75 = vld [vmem:[%s1 + $0x108] sm:$0xff]
    %v76 = vld [vmem:[%s1 + $0x110] sm:$0xff]
    %v77 = vld [vmem:[%s1 + $0x118] sm:$0xff]
    %v78 = vld [vmem:[%s1 + $0x120] sm:$0xff]
    %v79 = vld [vmem:[%s1 + $0x128] sm:$0xff]
    %v80 = vld [vmem:[%s1 + $0x130] sm:$0xff]
    %v81 = vld [vmem:[%s1 + $0x138] sm:$0xff]
    %v82 = vld [vmem:[%s1 + $0x140] sm:$0xff]
    %v83 = vld [vmem:[%s1 + $0x148] sm:$0xff]
    %v84 = vld [vmem:[%s1 + $0x150] sm:$0xff]
    %v85 = vld [vmem:[%s1 + $0x158] sm:$0xff]
    %v86 = vld [vmem:[%s1 + $0x160] sm:$0xff]
    %v87 = vld [vmem:[%s1 + $0x168] sm:$0xff]
    %v88 = vld [vmem:[%s1 + $0x170] sm:$0xff]
    %v89 = vld [vmem:[%s1 + $0x178] sm:$0xff]
    %v90 = vld [vmem:[%s1 + $0x180] sm:$0xff]
    %v91 = vld [vmem:[%s1 + $0x188] sm:$0xff]
    %v92 = vld [vmem:[%s1 + $0x190] sm:$0xff]
    %v93 = vld [vmem:[%s1 + $0x198] sm:$0xff]
    %v94 = vld [vmem:[%s1 + $0x1a0] sm:$0xff]
    %v95 = vld [vmem:[%s1 + $0x1a8] sm:$0xff]
    %v96 = vld [vmem:[%s1 + $0x1b0] sm:$0xff]
    %v97 = vld [vmem:[%s1 + $0x1b8] sm:$0xff]
    %v98 = vld [vmem:[%s1 + $0x1c0] sm:$0xff]
    %v99 = vld [vmem:[%s1 + $0x1c8] sm:$0xff]
    %v100 = vld [vmem:[%s1 + $0x1d0] sm:$0xff]
    %v101 = vld [vmem:[%s1 + $0x1d8] sm:$0xff]
    %v102 = vld [vmem:[%s1 + $0x1e0] sm:$0xff]
    %v103 = vld [vmem:[%s1 + $0x1e8] sm:$0xff]
    %v104 = vld [vmem:[%s1 + $0x1f0] sm:$0xff]
    %v105 = vld [vmem:[%s1 + $0x1f8] sm:$0xff]
    %v106 = vld [vmem:[%s1 + $0x200] sm:$0xff]
    %v107 = vld [vmem:[%s1 + $0x208] sm:$0xff]
    %v108 = vld [vmem:[%s1 + $0x210] sm:$0xff]
    %v109 = vld [vmem:[%s1 + $0x218] sm:$0xff]
    %v110 = vld [vmem:[%s1 + $0x220] sm:$0xff]
    %v111 = vld [vmem:[%s1 + $0x228] sm:$0xff]
    %v112 = vld [vmem:[%s1 + $0x230] sm:$0xff]
    %v113 = vld [vmem:[%s1 + $0x238] sm:$0xff]
    %v114 = vld [vmem:[%s1 + $0x240] sm:$0xff]
    %v115 = vld [vmem:[%s1 + $0x248] sm:$0xff]
    %v116 = vld [vmem:[%s1 + $0x250] sm:$0xff]
    %v117 = vld [vmem:[%s1 + $0x258] sm:$0xff]
    %v118 = vld [vmem:[%s1 + $0x260] sm:$0xff]
    %v119 = vld [vmem:[%s1 + $0x268] sm:$0xff]
    %v120 = vld [vmem:[%s1 + $0x270] sm:$0xff]
    %v121 = vld [vmem:[%s1 + $0x278] sm:$0xff]
    %v122 = vld [vmem:[%s1 + $0x280] sm:$0xff]
    %v123 = vld [vmem:[%s1 + $0x288] sm:$0xff]
    %v124 = vld [vmem:[%s1 + $0x290] sm:$0xff]
    %v125 = vld [vmem:[%s1 + $0x298] sm:$0xff]
    %v126 = vld [vmem:[%s1 + $0x2a0] sm:$0xff]
    %v127 = vld [vmem:[%s1 + $0x2a8] sm:$0xff]
    %v128 = vld [vmem:[%s1 + $0x2b0] sm:$0xff]
    %v129 = vld [vmem:[%s1 + $0x2b8] sm:$0xff]
    %v130 = vld [vmem:[%s1 + $0x2c0] sm:$0xff]
    %v131 = vld [vmem:[%s1 + $0x2c8] sm:$0xff]
    %v132 = vld [vmem:[%s1 + $0x2d0] sm:$0xff]
    %v133 = vld [vmem:[%s1 + $0x2d8] sm:$0xff]
    %v134 = vld [vmem:[%s1 + $0x2e0] sm:$0xff]
    %v135 = vld [vmem:[%s1 + $0x2e8] sm:$0xff]
    %v136 = vld [vmem:[%s1 + $0x2f0] sm:$0xff]
    %v137 = vld [vmem:[%s1 + $0x2f8] sm:$0xff]
    %v138 = vld [vmem:[%s1 + $0x300] sm:$0xff]
    %v139 = vld [vmem:[%s1 + $0x308] sm:$0xff]
    %v140 = vld [vmem:[%s1 + $0x310] sm:$0xff]
    %v141 = vld [vmem:[%s1 + $0x318] sm:$0xff]
    %v142 = vld [vmem:[%s1 + $0x320] sm:$0xff]
    %v143 = vld [vmem:[%s1 + $0x328] sm:$0xff]
    %v144 = vld [vmem:[%s1 + $0x330] sm:$0xff]
    %v145 = vld [vmem:[%s1 + $0x338] sm:$0xff]
    %v146 = vld [vmem:[%s1 + $0x340] sm:$0xff]
    %v147 = vld [vmem:[%s1 + $0x348] sm:$0xff]
    %v148 = vld [vmem:[%s1 + $0x350] sm:$0xff]
    %v149 = vld [vmem:[%s1 + $0x358] sm:$0xff]
    %v150 = vld [vmem:[%s1 + $0x360] sm:$0xff]
    %v151 = vld [vmem:[%s1 + $0x368] sm:$0xff]
    %v152 = vld [vmem:[%s1 + $0x370] sm:$0xff]
    %v153 = vld [vmem:[%s1 + $0x378] sm:$0xff]
    %v154 = vld [vmem:[%s1 + $0x380] sm:$0xff]
    %v155 = vld [vmem:[%s1 + $0x388] sm:$0xff]
    %v156 = vld [vmem:[%s1 + $0x390] sm:$0xff]
    %v157 = vld [vmem:[%s1 + $0x398] sm:$0xff]
    %v158 = vld [vmem:[%s1 + $0x3a0] sm:$0xff]
    %v159 = vld [vmem:[%s1 + $0x3a8] sm:$0xff]
    %v160 = vld [vmem:[%s1 + $0x3b0] sm:$0xff]
    %v161 = vld [vmem:[%s1 + $0x3b8] sm:$0xff]
    %v162 = vld [vmem:[%s1 + $0x3c0] sm:$0xff]
    %v163 = vld [vmem:[%s1 + $0x3c8] sm:$0xff]
    %v164 = vld [vmem:[%s1 + $0x3d0] sm:$0xff]
    %v165 = vld [vmem:[%s1 + $0x3d8] sm:$0xff]
    %v166 = vld [vmem:[%s1 + $0x3e0] sm:$0xff]
    %v167 = vld [vmem:[%s1 + $0x3e8] sm:$0xff]
    %v168 = vld [vmem:[%s1 + $0x3f0] sm:$0xff]
    %v169 = vld [vmem:[%s1 + $0x3f8] sm:$0xff]
    %v170 = vld [vmem:[%s1 + $0x400] sm:$0xff]
    %v171 = vld [vmem:[%s1 + $0x408] sm:$0xff]
    %v172 = vld [vmem:[%s1 + $0x410] sm:$0xff]
    %v173 = vld [vmem:[%s1 + $0x418] sm:$0xff]
    %v174 = vld [vmem:[%s1 + $0x420] sm:$0xff]
    %v175 = vld [vmem:[%s1 + $0x428] sm:$0xff]
    %v176 = vld [vmem:[%s1 + $0x430] sm:$0xff]
    %v177 = vld [vmem:[%s1 + $0x438] sm:$0xff]
    %v178 = vld [vmem:[%s1 + $0x440] sm:$0xff]
    %v179 = vld [vmem:[%s1 + $0x448] sm:$0xff]
    %v180 = vld [vmem:[%s1 + $0x450] sm:$0xff]
    %v181 = vld [vmem:[%s1 + $0x458] sm:$0xff]
    %v182 = vld [vmem:[%s1 + $0x460] sm:$0xff]
    %v183 = vld [vmem:[%s1 + $0x468] sm:$0xff]
    %v184 = vld [vmem:[%s1 + $0x470] sm:$0xff]
    %v185 = vld [vmem:[%s1 + $0x478] sm:$0xff]
    %v186 = vld [vmem:[%s1 + $0x480] sm:$0xff]
    %v187 = vld [vmem:[%s1 + $0x488] sm:$0xff]
    %v188 = vld [vmem:[%s1 + $0x490] sm:$0xff]
    %v189 = vld [vmem:[%s1 + $0x498] sm:$0xff]
    %v190 = vld [vmem:[%s1 + $0x4a0] sm:$0xff]
    %v191 = vld [vmem:[%s1 + $0x4a8] sm:$0xff]
    %v192 = vld [vmem:[%s1 + $0x4b0] sm:$0xff]
    %v193 = vld [vmem:[%s1 + $0x4b8] sm:$0xff]
    %v194 = vld [vmem:[%s1 + $0x4c0] sm:$0xff]
    %v195 = vld [vmem:[%s1 + $0x4c8] sm:$0xff]
    %v196 = vld [vmem:[%s1 + $0x4d0] sm:$0xff]
    %v197 = vld [vmem:[%s1 + $0x4d8] sm:$0xff]
    %v198 = vld [vmem:[%s1 + $0x4e0] sm:$0xff]
    %v199 = vld [vmem:[%s1 + $0x4e8] sm:$0xff]
    %v200 = vld [vmem:[%s1 + $0x4f0] sm:$0xff]
    %v201 = vld [vmem:[%s1 + $0x4f8] sm:$0xff]
    %v202 = vld [vmem:[%s1 + $0x500] sm:$0xff]
    %v203 = vld [vmem:[%s1 + $0x508] sm:$0xff]
    %v204 = vld [vmem:[%s1 + $0x510] sm:$0xff]
    %v205 = vld [vmem:[%s1 + $0x518] sm:$0xff]
    %v206 = vld [vmem:[%s1 + $0x520] sm:$0xff]
    %v207 = vld [vmem:[%s1 + $0x528] sm:$0xff]
    %v208 = vld [vmem:[%s1 + $0x530] sm:$0xff]
    %v209 = vld [vmem:[%s1 + $0x538] sm:$0xff]
    %v210 = vld [vmem:[%s1 + $0x540] sm:$0xff]
    %v211 = vld [vmem:[%s1 + $0x548] sm:$0xff]
    %v212 = vld [vmem:[%s1 + $0x550] sm:$0xff]
    %v213 = vld [vmem:[%s1 + $0x558] sm:$0xff]
    %v214 = vld [vmem:[%s1 + $0x560] sm:$0xff]
    %v215 = vld [vmem:[%s1 + $0x568] sm:$0xff]
    %v216 = vld [vmem:[%s1 + $0x570] sm:$0xff]
    %v217 = vld [vmem:[%s1 + $0x578] sm:$0xff]
    %v218 = vld [vmem:[%s1 + $0x580] sm:$0xff]
    %v219 = vld [vmem:[%s1 + $0x588] sm:$0xff]
    %v220 = vld [vmem:[%s1 + $0x590] sm:$0xff]
    %v221 = vld [vmem:[%s1 + $0x598] sm:$0xff]
    %v222 = vld [vmem:[%s1 + $0x5a0] sm:$0xff]
    %v223 = vld [vmem:[%s1 + $0x5a8] sm:$0xff]
    %v224 = vld [vmem:[%s1 + $0x5b0] sm:$0xff]
    %v225 = vld [vmem:[%s1 + $0x5b8] sm:$0xff]
    %v226 = vld [vmem:[%s1 + $0x5c0] sm:$0xff]
    %v227 = vld [vmem:[%s1 + $0x5c8] sm:$0xff]
    %v228 = vld [vmem:[%s1 + $0x5d0] sm:$0xff]
    %v229 = vld [vmem:[%s1 + $0x5d8] sm:$0xff]
    %v230 = vld [vmem:[%s1 + $0x5e0] sm:$0xff]
    %v231 = vld [vmem:[%s1 + $0x5e8] sm:$0xff]
    %v232 = vld [vmem:[%s1 + $0x5f0] sm:$0xff]
    %v233 = vld [vmem:[%s1 + $0x5f8] sm:$0xff]
    %v234 = vld [vmem:[%s1 + $0x600] sm:$0xff]
    %v235 = vld [vmem:[%s1 + $0x608] sm:$0xff]
    %v236 = vld [vmem:[%s1 + $0x610] sm:$0xff]
    %v237 = vld [vmem:[%s1 + $0x618] sm:$0xff]
    %v238 = vld [vmem:[%s2] sm:$0xf]
    %v240 = vlaneseq
    %v241 = vshrl.u32 %v240, 7
    %v242 = vsub.s32 0, %v241
    %v243 = vrot.slane %v238, %v242
    %v244 = vlaneseq
    %v245 = vshrl.u32 %v244, 7
    %v246 = vsub.s32 1, %v245
    %v247 = vrot.slane %v238, %v246
    %v248 = vlaneseq
    %v249 = vshrl.u32 %v248, 7
    %v250 = vsub.s32 2, %v249
    %v251 = vrot.slane %v238, %v250
    %v252 = vlaneseq
    %v253 = vshrl.u32 %v252, 7
    %v254 = vsub.s32 3, %v253
    %v255 = vrot.slane %v238, %v254
    %v456 = vunpack.c.l.b16 %v42
    %v457 = vunpack.c.h.b16 %v42
    %v458 = vunpack.c.l.b16 %v43
    %v459 = vunpack.c.h.b16 %v43
    %v460 = vunpack.c.l.b16 %v44
    %v461 = vunpack.c.h.b16 %v44
    %v462 = vunpack.c.l.b16 %v45
    %v463 = vunpack.c.h.b16 %v45
    %v464 = vunpack.c.l.b16 %v46
    %v465 = vunpack.c.h.b16 %v46
    %v466 = vunpack.c.l.b16 %v47
    %v467 = vunpack.c.h.b16 %v47
    %v468 = vunpack.c.l.b16 %v48
    %v469 = vunpack.c.h.b16 %v48
    %v470 = vunpack.c.l.b16 %v49
    %v471 = vunpack.c.h.b16 %v49
    %v472 = vunpack.c.l.b16 %v50
    %v473 = vunpack.c.h.b16 %v50
    %v474 = vunpack.c.l.b16 %v51
    %v475 = vunpack.c.h.b16 %v51
    %v476 = vunpack.c.l.b16 %v52
    %v477 = vunpack.c.h.b16 %v52
    %v478 = vunpack.c.l.b16 %v53
    %v479 = vunpack.c.h.b16 %v53
    %v480 = vunpack.c.l.b16 %v54
    %v481 = vunpack.c.h.b16 %v54
    %v482 = vunpack.c.l.b16 %v55
    %v483 = vunpack.c.h.b16 %v55
    %v484 = vunpack.c.l.b16 %v56
    %v485 = vunpack.c.h.b16 %v56
    %v486 = vunpack.c.l.b16 %v57
    %v487 = vunpack.c.h.b16 %v57
    %v488 = vunpack.c.l.b16 %v58
    %v489 = vunpack.c.h.b16 %v58
    %v490 = vunpack.c.l.b16 %v59
    %v491 = vunpack.c.h.b16 %v59
    %v492 = vunpack.c.l.b16 %v60
    %v493 = vunpack.c.h.b16 %v60
    %v494 = vunpack.c.l.b16 %v61
    %v495 = vunpack.c.h.b16 %v61
    %v496 = vunpack.c.l.b16 %v62
    %v497 = vunpack.c.h.b16 %v62
    %v498 = vunpack.c.l.b16 %v63
    %v499 = vunpack.c.h.b16 %v63
    %v500 = vunpack.c.l.b16 %v64
    %v501 = vunpack.c.h.b16 %v64
    %v502 = vunpack.c.l.b16 %v65
    %v503 = vunpack.c.h.b16 %v65
    %v504 = vunpack.c.l.b16 %v66
    %v505 = vunpack.c.h.b16 %v66
    %v506 = vunpack.c.l.b16 %v67
    %v507 = vunpack.c.h.b16 %v67
    %v508 = vunpack.c.l.b16 %v68
    %v509 = vunpack.c.h.b16 %v68
    %v510 = vunpack.c.l.b16 %v69
    %v511 = vunpack.c.h.b16 %v69
    %v512 = vunpack.c.l.b16 %v70
    %v513 = vunpack.c.h.b16 %v70
    %v514 = vunpack.c.l.b16 %v71
    %v515 = vunpack.c.h.b16 %v71
    %v516 = vunpack.c.l.b16 %v72
    %v517 = vunpack.c.h.b16 %v72
    %v518 = vunpack.c.l.b16 %v73
    %v519 = vunpack.c.h.b16 %v73
    %v520 = vunpack.c.l.b16 %v74
    %v521 = vunpack.c.h.b16 %v74
    %v522 = vunpack.c.l.b16 %v75
    %v523 = vunpack.c.h.b16 %v75
    %v524 = vunpack.c.l.b16 %v76
    %v525 = vunpack.c.h.b16 %v76
    %v526 = vunpack.c.l.b16 %v77
    %v527 = vunpack.c.h.b16 %v77
    %v528 = vunpack.c.l.b16 %v78
    %v529 = vunpack.c.h.b16 %v78
    %v530 = vunpack.c.l.b16 %v79
    %v531 = vunpack.c.h.b16 %v79
    %v532 = vunpack.c.l.b16 %v80
    %v533 = vunpack.c.h.b16 %v80
    %v534 = vunpack.c.l.b16 %v81
    %v535 = vunpack.c.h.b16 %v81
    %v536 = vunpack.c.l.b16 %v82
    %v537 = vunpack.c.h.b16 %v82
    %v538 = vunpack.c.l.b16 %v83
    %v539 = vunpack.c.h.b16 %v83
    %v540 = vunpack.c.l.b16 %v84
    %v541 = vunpack.c.h.b16 %v84
    %v542 = vunpack.c.l.b16 %v85
    %v543 = vunpack.c.h.b16 %v85
    %v544 = vunpack.c.l.b16 %v86
    %v545 = vunpack.c.h.b16 %v86
    %v546 = vunpack.c.l.b16 %v87
    %v547 = vunpack.c.h.b16 %v87
    %v548 = vunpack.c.l.b16 %v88
    %v549 = vunpack.c.h.b16 %v88
    %v550 = vunpack.c.l.b16 %v89
    %v551 = vunpack.c.h.b16 %v89
    %v552 = vunpack.c.l.b16 %v90
    %v553 = vunpack.c.h.b16 %v90
    %v554 = vunpack.c.l.b16 %v91
    %v555 = vunpack.c.h.b16 %v91
    %v556 = vunpack.c.l.b16 %v92
    %v557 = vunpack.c.h.b16 %v92
    %v558 = vunpack.c.l.b16 %v93
    %v559 = vunpack.c.h.b16 %v93
    %v560 = vunpack.c.l.b16 %v94
    %v561 = vunpack.c.h.b16 %v94
    %v562 = vunpack.c.l.b16 %v95
    %v563 = vunpack.c.h.b16 %v95
    %v564 = vunpack.c.l.b16 %v96
    %v565 = vunpack.c.h.b16 %v96
    %v566 = vunpack.c.l.b16 %v97
    %v567 = vunpack.c.h.b16 %v97
    %v568 = vunpack.c.l.b16 %v98
    %v569 = vunpack.c.h.b16 %v98
    %v570 = vunpack.c.l.b16 %v99
    %v571 = vunpack.c.h.b16 %v99
    %v572 = vunpack.c.l.b16 %v100
    %v573 = vunpack.c.h.b16 %v100
    %v574 = vunpack.c.l.b16 %v101
    %v575 = vunpack.c.h.b16 %v101
    %v576 = vunpack.c.l.b16 %v102
    %v577 = vunpack.c.h.b16 %v102
    %v578 = vunpack.c.l.b16 %v103
    %v579 = vunpack.c.h.b16 %v103
    %v580 = vunpack.c.l.b16 %v104
    %v581 = vunpack.c.h.b16 %v104
    %v582 = vunpack.c.l.b16 %v105
    %v583 = vunpack.c.h.b16 %v105
    %v584 = vunpack.c.l.b16 %v106
    %v585 = vunpack.c.h.b16 %v106
    %v586 = vunpack.c.l.b16 %v107
    %v587 = vunpack.c.h.b16 %v107
    %v588 = vunpack.c.l.b16 %v108
    %v589 = vunpack.c.h.b16 %v108
    %v590 = vunpack.c.l.b16 %v109
    %v591 = vunpack.c.h.b16 %v109
    %v592 = vunpack.c.l.b16 %v110
    %v593 = vunpack.c.h.b16 %v110
    %v594 = vunpack.c.l.b16 %v111
    %v595 = vunpack.c.h.b16 %v111
    %v596 = vunpack.c.l.b16 %v112
    %v597 = vunpack.c.h.b16 %v112
    %v598 = vunpack.c.l.b16 %v113
    %v599 = vunpack.c.h.b16 %v113
    %v600 = vunpack.c.l.b16 %v114
    %v601 = vunpack.c.h.b16 %v114
    %v602 = vunpack.c.l.b16 %v115
    %v603 = vunpack.c.h.b16 %v115
    %v604 = vunpack.c.l.b16 %v116
    %v605 = vunpack.c.h.b16 %v116
    %v606 = vunpack.c.l.b16 %v117
    %v607 = vunpack.c.h.b16 %v117
    %v608 = vunpack.c.l.b16 %v118
    %v609 = vunpack.c.h.b16 %v118
    %v610 = vunpack.c.l.b16 %v119
    %v611 = vunpack.c.h.b16 %v119
    %v612 = vunpack.c.l.b16 %v120
    %v613 = vunpack.c.h.b16 %v120
    %v614 = vunpack.c.l.b16 %v121
    %v615 = vunpack.c.h.b16 %v121
    %v616 = vunpack.c.l.b16 %v122
    %v617 = vunpack.c.h.b16 %v122
    %v618 = vunpack.c.l.b16 %v123
    %v619 = vunpack.c.h.b16 %v123
    %v620 = vunpack.c.l.b16 %v124
    %v621 = vunpack.c.h.b16 %v124
    %v622 = vunpack.c.l.b16 %v125
    %v623 = vunpack.c.h.b16 %v125
    %v624 = vunpack.c.l.b16 %v126
    %v625 = vunpack.c.h.b16 %v126
    %v626 = vunpack.c.l.b16 %v127
    %v627 = vunpack.c.h.b16 %v127
    %v628 = vunpack.c.l.b16 %v128
    %v629 = vunpack.c.h.b16 %v128
    %v630 = vunpack.c.l.b16 %v129
    %v631 = vunpack.c.h.b16 %v129
    %v632 = vunpack.c.l.b16 %v130
    %v633 = vunpack.c.h.b16 %v130
    %v634 = vunpack.c.l.b16 %v131
    %v635 = vunpack.c.h.b16 %v131
    %v636 = vunpack.c.l.b16 %v132
    %v637 = vunpack.c.h.b16 %v132
    %v638 = vunpack.c.l.b16 %v133
    %v639 = vunpack.c.h.b16 %v133
    %v640 = vunpack.c.l.b16 %v134
    %v641 = vunpack.c.h.b16 %v134
    %v642 = vunpack.c.l.b16 %v135
    %v643 = vunpack.c.h.b16 %v135
    %v644 = vunpack.c.l.b16 %v136
    %v645 = vunpack.c.h.b16 %v136
    %v646 = vunpack.c.l.b16 %v137
    %v647 = vunpack.c.h.b16 %v137
    %v648 = vunpack.c.l.b16 %v138
    %v649 = vunpack.c.h.b16 %v138
    %v650 = vunpack.c.l.b16 %v139
    %v651 = vunpack.c.h.b16 %v139
    %v652 = vunpack.c.l.b16 %v140
    %v653 = vunpack.c.h.b16 %v140
    %v654 = vunpack.c.l.b16 %v141
    %v655 = vunpack.c.h.b16 %v141
    %v656 = vunpack.c.l.b16 %v142
    %v657 = vunpack.c.h.b16 %v142
    %v658 = vunpack.c.l.b16 %v143
    %v659 = vunpack.c.h.b16 %v143
    %v660 = vunpack.c.l.b16 %v144
    %v661 = vunpack.c.h.b16 %v144
    %v662 = vunpack.c.l.b16 %v145
    %v663 = vunpack.c.h.b16 %v145
    %v664 = vunpack.c.l.b16 %v146
    %v665 = vunpack.c.h.b16 %v146
    %v666 = vunpack.c.l.b16 %v147
    %v667 = vunpack.c.h.b16 %v147
    %v668 = vunpack.c.l.b16 %v148
    %v669 = vunpack.c.h.b16 %v148
    %v670 = vunpack.c.l.b16 %v149
    %v671 = vunpack.c.h.b16 %v149
    %v672 = vunpack.c.l.b16 %v150
    %v673 = vunpack.c.h.b16 %v150
    %v674 = vunpack.c.l.b16 %v151
    %v675 = vunpack.c.h.b16 %v151
    %v676 = vunpack.c.l.b16 %v152
    %v677 = vunpack.c.h.b16 %v152
    %v678 = vunpack.c.l.b16 %v153
    %v679 = vunpack.c.h.b16 %v153
    %v680 = vunpack.c.l.b16 %v154
    %v681 = vunpack.c.h.b16 %v154
    %v682 = vunpack.c.l.b16 %v155
    %v683 = vunpack.c.h.b16 %v155
    %v684 = vunpack.c.l.b16 %v156
    %v685 = vunpack.c.h.b16 %v156
    %v686 = vunpack.c.l.b16 %v157
    %v687 = vunpack.c.h.b16 %v157
    %v688 = vunpack.c.l.b16 %v158
    %v689 = vunpack.c.h.b16 %v158
    %v690 = vunpack.c.l.b16 %v159
    %v691 = vunpack.c.h.b16 %v159
    %v692 = vunpack.c.l.b16 %v160
    %v693 = vunpack.c.h.b16 %v160
    %v694 = vunpack.c.l.b16 %v161
    %v695 = vunpack.c.h.b16 %v161
    %v696 = vunpack.c.l.b16 %v162
    %v697 = vunpack.c.h.b16 %v162
    %v698 = vunpack.c.l.b16 %v163
    %v699 = vunpack.c.h.b16 %v163
    %v700 = vunpack.c.l.b16 %v164
    %v701 = vunpack.c.h.b16 %v164
    %v702 = vunpack.c.l.b16 %v165
    %v703 = vunpack.c.h.b16 %v165
    %v704 = vunpack.c.l.b16 %v166
    %v705 = vunpack.c.h.b16 %v166
    %v706 = vunpack.c.l.b16 %v167
    %v707 = vunpack.c.h.b16 %v167
    %v708 = vunpack.c.l.b16 %v168
    %v709 = vunpack.c.h.b16 %v168
    %v710 = vunpack.c.l.b16 %v169
    %v711 = vunpack.c.h.b16 %v169
    %v712 = vunpack.c.l.b16 %v170
    %v713 = vunpack.c.h.b16 %v170
    %v714 = vunpack.c.l.b16 %v171
    %v715 = vunpack.c.h.b16 %v171
    %v716 = vunpack.c.l.b16 %v172
    %v717 = vunpack.c.h.b16 %v172
    %v718 = vunpack.c.l.b16 %v173
    %v719 = vunpack.c.h.b16 %v173
    %v720 = vunpack.c.l.b16 %v174
    %v721 = vunpack.c.h.b16 %v174
    %v722 = vunpack.c.l.b16 %v175
    %v723 = vunpack.c.h.b16 %v175
    %v724 = vunpack.c.l.b16 %v176
    %v725 = vunpack.c.h.b16 %v176
    %v726 = vunpack.c.l.b16 %v177
    %v727 = vunpack.c.h.b16 %v177
    %v728 = vunpack.c.l.b16 %v178
    %v729 = vunpack.c.h.b16 %v178
    %v730 = vunpack.c.l.b16 %v179
    %v731 = vunpack.c.h.b16 %v179
    %v732 = vunpack.c.l.b16 %v180
    %v733 = vunpack.c.h.b16 %v180
    %v734 = vunpack.c.l.b16 %v181
    %v735 = vunpack.c.h.b16 %v181
    %v736 = vunpack.c.l.b16 %v182
    %v737 = vunpack.c.h.b16 %v182
    %v738 = vunpack.c.l.b16 %v183
    %v739 = vunpack.c.h.b16 %v183
    %v740 = vunpack.c.l.b16 %v184
    %v741 = vunpack.c.h.b16 %v184
    %v742 = vunpack.c.l.b16 %v185
    %v743 = vunpack.c.h.b16 %v185
    %v744 = vunpack.c.l.b16 %v186
    %v745 = vunpack.c.h.b16 %v186
    %v746 = vunpack.c.l.b16 %v187
    %v747 = vunpack.c.h.b16 %v187
    %v748 = vunpack.c.l.b16 %v188
    %v749 = vunpack.c.h.b16 %v188
    %v750 = vunpack.c.l.b16 %v189
    %v751 = vunpack.c.h.b16 %v189
    %v752 = vunpack.c.l.b16 %v190
    %v753 = vunpack.c.h.b16 %v190
    %v754 = vunpack.c.l.b16 %v191
    %v755 = vunpack.c.h.b16 %v191
    %v756 = vunpack.c.l.b16 %v192
    %v757 = vunpack.c.h.b16 %v192
    %v758 = vunpack.c.l.b16 %v193
    %v759 = vunpack.c.h.b16 %v193
    %v760 = vunpack.c.l.b16 %v194
    %v761 = vunpack.c.h.b16 %v194
    %v762 = vunpack.c.l.b16 %v195
    %v763 = vunpack.c.h.b16 %v195
    %v764 = vunpack.c.l.b16 %v196
    %v765 = vunpack.c.h.b16 %v196
    %v766 = vunpack.c.l.b16 %v197
    %v767 = vunpack.c.h.b16 %v197
    %v768 = vunpack.c.l.b16 %v198
    %v769 = vunpack.c.h.b16 %v198
    %v770 = vunpack.c.l.b16 %v199
    %v771 = vunpack.c.h.b16 %v199
    %v772 = vunpack.c.l.b16 %v200
    %v773 = vunpack.c.h.b16 %v200
    %v774 = vunpack.c.l.b16 %v201
    %v775 = vunpack.c.h.b16 %v201
    %v776 = vunpack.c.l.b16 %v202
    %v777 = vunpack.c.h.b16 %v202
    %v778 = vunpack.c.l.b16 %v203
    %v779 = vunpack.c.h.b16 %v203
    %v780 = vunpack.c.l.b16 %v204
    %v781 = vunpack.c.h.b16 %v204
    %v782 = vunpack.c.l.b16 %v205
    %v783 = vunpack.c.h.b16 %v205
    %v784 = vunpack.c.l.b16 %v206
    %v785 = vunpack.c.h.b16 %v206
    %v786 = vunpack.c.l.b16 %v207
    %v787 = vunpack.c.h.b16 %v207
    %v788 = vunpack.c.l.b16 %v208
    %v789 = vunpack.c.h.b16 %v208
    %v790 = vunpack.c.l.b16 %v209
    %v791 = vunpack.c.h.b16 %v209
    %v792 = vunpack.c.l.b16 %v210
    %v793 = vunpack.c.h.b16 %v210
    %v794 = vunpack.c.l.b16 %v211
    %v795 = vunpack.c.h.b16 %v211
    %v796 = vunpack.c.l.b16 %v212
    %v797 = vunpack.c.h.b16 %v212
    %v798 = vunpack.c.l.b16 %v213
    %v799 = vunpack.c.h.b16 %v213
    %v800 = vunpack.c.l.b16 %v214
    %v801 = vunpack.c.h.b16 %v214
    %v802 = vunpack.c.l.b16 %v215
    %v803 = vunpack.c.h.b16 %v215
    %v804 = vunpack.c.l.b16 %v216
    %v805 = vunpack.c.h.b16 %v216
    %v806 = vunpack.c.l.b16 %v217
    %v807 = vunpack.c.h.b16 %v217
    %v808 = vunpack.c.l.b16 %v218
    %v809 = vunpack.c.h.b16 %v218
    %v810 = vunpack.c.l.b16 %v219
    %v811 = vunpack.c.h.b16 %v219
    %v812 = vunpack.c.l.b16 %v220
    %v813 = vunpack.c.h.b16 %v220
    %v814 = vunpack.c.l.b16 %v221
    %v815 = vunpack.c.h.b16 %v221
    %v816 = vunpack.c.l.b16 %v222
    %v817 = vunpack.c.h.b16 %v222
    %v818 = vunpack.c.l.b16 %v223
    %v819 = vunpack.c.h.b16 %v223
    %v820 = vunpack.c.l.b16 %v224
    %v821 = vunpack.c.h.b16 %v224
    %v822 = vunpack.c.l.b16 %v225
    %v823 = vunpack.c.h.b16 %v225
    %v824 = vunpack.c.l.b16 %v226
    %v825 = vunpack.c.h.b16 %v226
    %v826 = vunpack.c.l.b16 %v227
    %v827 = vunpack.c.h.b16 %v227
    %v828 = vunpack.c.l.b16 %v228
    %v829 = vunpack.c.h.b16 %v228
    %v830 = vunpack.c.l.b16 %v229
    %v831 = vunpack.c.h.b16 %v229
    %v832 = vunpack.c.l.b16 %v230
    %v833 = vunpack.c.h.b16 %v230
    %v834 = vunpack.c.l.b16 %v231
    %v835 = vunpack.c.h.b16 %v231
    %v836 = vunpack.c.l.b16 %v232
    %v837 = vunpack.c.h.b16 %v232
    %v838 = vunpack.c.l.b16 %v233
    %v839 = vunpack.c.h.b16 %v233
    %v840 = vunpack.c.l.b16 %v234
    %v841 = vunpack.c.h.b16 %v234
    %v842 = vunpack.c.l.b16 %v235
    %v843 = vunpack.c.h.b16 %v235
    %v844 = vunpack.c.l.b16 %v236
    %v845 = vunpack.c.h.b16 %v236
    %v846 = vunpack.c.l.b16 %v237
    %v847 = vunpack.c.h.b16 %v237
    %v848 = vpack.c.b16 %v460, %v456
    %v849 = vpack.c.b16 %v461, %v457
    %v850 = vpack.c.b16 %v462, %v458
    %v851 = vpack.c.b16 %v463, %v459
    %v852 = vpack.c.b16 %v468, %v464
    %v853 = vpack.c.b16 %v469, %v465
    %v854 = vpack.c.b16 %v470, %v466
    %v855 = vpack.c.b16 %v471, %v467
    %v856 = vpack.c.b16 %v476, %v472
    %v857 = vpack.c.b16 %v477, %v473
    %v858 = vpack.c.b16 %v478, %v474
    %v859 = vpack.c.b16 %v479, %v475
    %v860 = vpack.c.b16 %v484, %v480
    %v861 = vpack.c.b16 %v485, %v481
    %v862 = vpack.c.b16 %v486, %v482
    %v863 = vpack.c.b16 %v487, %v483
    %v864 = vpack.c.b16 %v492, %v488
    %v865 = vpack.c.b16 %v493, %v489
    %v866 = vpack.c.b16 %v494, %v490
    %v867 = vpack.c.b16 %v495, %v491
    %v868 = vpack.c.b16 %v500, %v496
    %v869 = vpack.c.b16 %v501, %v497
    %v870 = vpack.c.b16 %v502, %v498
    %v871 = vpack.c.b16 %v503, %v499
    %v872 = vpack.c.b16 %v508, %v504
    %v873 = vpack.c.b16 %v509, %v505
    %v874 = vpack.c.b16 %v510, %v506
    %v875 = vpack.c.b16 %v511, %v507
    %v876 = vpack.c.b16 %v516, %v512
    %v877 = vpack.c.b16 %v517, %v513
    %v878 = vpack.c.b16 %v518, %v514
    %v879 = vpack.c.b16 %v519, %v515
    %v880 = vpack.c.b16 %v524, %v520
    %v881 = vpack.c.b16 %v525, %v521
    %v882 = vpack.c.b16 %v526, %v522
    %v883 = vpack.c.b16 %v527, %v523
    %v884 = vpack.c.b16 %v532, %v528
    %v885 = vpack.c.b16 %v533, %v529
    %v886 = vpack.c.b16 %v534, %v530
    %v887 = vpack.c.b16 %v535, %v531
    %v888 = vpack.c.b16 %v540, %v536
    %v889 = vpack.c.b16 %v541, %v537
    %v890 = vpack.c.b16 %v542, %v538
    %v891 = vpack.c.b16 %v543, %v539
    %v892 = vpack.c.b16 %v548, %v544
    %v893 = vpack.c.b16 %v549, %v545
    %v894 = vpack.c.b16 %v550, %v546
    %v895 = vpack.c.b16 %v551, %v547
    %v896 = vpack.c.b16 %v556, %v552
    %v897 = vpack.c.b16 %v557, %v553
    %v898 = vpack.c.b16 %v558, %v554
    %v899 = vpack.c.b16 %v559, %v555
    %v900 = vpack.c.b16 %v564, %v560
    %v901 = vpack.c.b16 %v565, %v561
    %v902 = vpack.c.b16 %v566, %v562
    %v903 = vpack.c.b16 %v567, %v563
    %v904 = vpack.c.b16 %v572, %v568
    %v905 = vpack.c.b16 %v573, %v569
    %v906 = vpack.c.b16 %v574, %v570
    %v907 = vpack.c.b16 %v575, %v571
    %v908 = vpack.c.b16 %v580, %v576
    %v909 = vpack.c.b16 %v581, %v577
    %v910 = vpack.c.b16 %v582, %v578
    %v911 = vpack.c.b16 %v583, %v579
    %v912 = vpack.c.b16 %v588, %v584
    %v913 = vpack.c.b16 %v589, %v585
    %v914 = vpack.c.b16 %v590, %v586
    %v915 = vpack.c.b16 %v591, %v587
    %v916 = vpack.c.b16 %v596, %v592
    %v917 = vpack.c.b16 %v597, %v593
    %v918 = vpack.c.b16 %v598, %v594
    %v919 = vpack.c.b16 %v599, %v595
    %v920 = vpack.c.b16 %v604, %v600
    %v921 = vpack.c.b16 %v605, %v601
    %v922 = vpack.c.b16 %v606, %v602
    %v923 = vpack.c.b16 %v607, %v603
    %v924 = vpack.c.b16 %v612, %v608
    %v925 = vpack.c.b16 %v613, %v609
    %v926 = vpack.c.b16 %v614, %v610
    %v927 = vpack.c.b16 %v615, %v611
    %v928 = vpack.c.b16 %v620, %v616
    %v929 = vpack.c.b16 %v621, %v617
    %v930 = vpack.c.b16 %v622, %v618
    %v931 = vpack.c.b16 %v623, %v619
    %v932 = vpack.c.b16 %v628, %v624
    %v933 = vpack.c.b16 %v629, %v625
    %v934 = vpack.c.b16 %v630, %v626
    %v935 = vpack.c.b16 %v631, %v627
    %v936 = vpack.c.b16 %v636, %v632
    %v937 = vpack.c.b16 %v637, %v633
    %v938 = vpack.c.b16 %v638, %v634
    %v939 = vpack.c.b16 %v639, %v635
    %v940 = vpack.c.b16 %v644, %v640
    %v941 = vpack.c.b16 %v645, %v641
    %v942 = vpack.c.b16 %v646, %v642
    %v943 = vpack.c.b16 %v647, %v643
    %v944 = vpack.c.b16 %v652, %v648
    %v945 = vpack.c.b16 %v653, %v649
    %v946 = vpack.c.b16 %v654, %v650
    %v947 = vpack.c.b16 %v655, %v651
    %v948 = vpack.c.b16 %v660, %v656
    %v949 = vpack.c.b16 %v661, %v657
    %v950 = vpack.c.b16 %v662, %v658
    %v951 = vpack.c.b16 %v663, %v659
    %v952 = vpack.c.b16 %v668, %v664
    %v953 = vpack.c.b16 %v669, %v665
    %v954 = vpack.c.b16 %v670, %v666
    %v955 = vpack.c.b16 %v671, %v667
    %v956 = vpack.c.b16 %v676, %v672
    %v957 = vpack.c.b16 %v677, %v673
    %v958 = vpack.c.b16 %v678, %v674
    %v959 = vpack.c.b16 %v679, %v675
    %v960 = vpack.c.b16 %v684, %v680
    %v961 = vpack.c.b16 %v685, %v681
    %v962 = vpack.c.b16 %v686, %v682
    %v963 = vpack.c.b16 %v687, %v683
    %v964 = vpack.c.b16 %v692, %v688
    %v965 = vpack.c.b16 %v693, %v689
    %v966 = vpack.c.b16 %v694, %v690
    %v967 = vpack.c.b16 %v695, %v691
    %v968 = vpack.c.b16 %v700, %v696
    %v969 = vpack.c.b16 %v701, %v697
    %v970 = vpack.c.b16 %v702, %v698
    %v971 = vpack.c.b16 %v703, %v699
    %v972 = vpack.c.b16 %v708, %v704
    %v973 = vpack.c.b16 %v709, %v705
    %v974 = vpack.c.b16 %v710, %v706
    %v975 = vpack.c.b16 %v711, %v707
    %v976 = vpack.c.b16 %v716, %v712
    %v977 = vpack.c.b16 %v717, %v713
    %v978 = vpack.c.b16 %v718, %v714
    %v979 = vpack.c.b16 %v719, %v715
    %v980 = vpack.c.b16 %v724, %v720
    %v981 = vpack.c.b16 %v725, %v721
    %v982 = vpack.c.b16 %v726, %v722
    %v983 = vpack.c.b16 %v727, %v723
    %v984 = vpack.c.b16 %v732, %v728
    %v985 = vpack.c.b16 %v733, %v729
    %v986 = vpack.c.b16 %v734, %v730
    %v987 = vpack.c.b16 %v735, %v731
    %v988 = vpack.c.b16 %v740, %v736
    %v989 = vpack.c.b16 %v741, %v737
    %v990 = vpack.c.b16 %v742, %v738
    %v991 = vpack.c.b16 %v743, %v739
    %v992 = vpack.c.b16 %v748, %v744
    %v993 = vpack.c.b16 %v749, %v745
    %v994 = vpack.c.b16 %v750, %v746
    %v995 = vpack.c.b16 %v751, %v747
    %v996 = vpack.c.b16 %v756, %v752
    %v997 = vpack.c.b16 %v757, %v753
    %v998 = vpack.c.b16 %v758, %v754
    %v999 = vpack.c.b16 %v759, %v755
    %v1000 = vpack.c.b16 %v764, %v760
    %v1001 = vpack.c.b16 %v765, %v761
    %v1002 = vpack.c.b16 %v766, %v762
    %v1003 = vpack.c.b16 %v767, %v763
    %v1004 = vpack.c.b16 %v772, %v768
    %v1005 = vpack.c.b16 %v773, %v769
    %v1006 = vpack.c.b16 %v774, %v770
    %v1007 = vpack.c.b16 %v775, %v771
    %v1008 = vpack.c.b16 %v780, %v776
    %v1009 = vpack.c.b16 %v781, %v777
    %v1010 = vpack.c.b16 %v782, %v778
    %v1011 = vpack.c.b16 %v783, %v779
    %v1012 = vpack.c.b16 %v788, %v784
    %v1013 = vpack.c.b16 %v789, %v785
    %v1014 = vpack.c.b16 %v790, %v786
    %v1015 = vpack.c.b16 %v791, %v787
    %v1016 = vpack.c.b16 %v796, %v792
    %v1017 = vpack.c.b16 %v797, %v793
    %v1018 = vpack.c.b16 %v798, %v794
    %v1019 = vpack.c.b16 %v799, %v795
    %v1020 = vpack.c.b16 %v804, %v800
    %v1021 = vpack.c.b16 %v805, %v801
    %v1022 = vpack.c.b16 %v806, %v802
    %v1023 = vpack.c.b16 %v807, %v803
    %v1024 = vpack.c.b16 %v812, %v808
    %v1025 = vpack.c.b16 %v813, %v809
    %v1026 = vpack.c.b16 %v814, %v810
    %v1027 = vpack.c.b16 %v815, %v811
    %v1028 = vpack.c.b16 %v820, %v816
    %v1029 = vpack.c.b16 %v821, %v817
    %v1030 = vpack.c.b16 %v822, %v818
    %v1031 = vpack.c.b16 %v823, %v819
    %v1032 = vpack.c.b16 %v828, %v824
    %v1033 = vpack.c.b16 %v829, %v825
    %v1034 = vpack.c.b16 %v830, %v826
    %v1035 = vpack.c.b16 %v831, %v827
    %v1036 = vpack.c.b16 %v836, %v832
    %v1037 = vpack.c.b16 %v837, %v833
    %v1038 = vpack.c.b16 %v838, %v834
    %v1039 = vpack.c.b16 %v839, %v835
    %v1040 = vpack.c.b16 %v844, %v840
    %v1041 = vpack.c.b16 %v845, %v841
    %v1042 = vpack.c.b16 %v846, %v842
    %v1043 = vpack.c.b16 %v847, %v843
    %vm1240 = vcmask 130048
    %v1242 = vsel %vm1240, %v41, 0
    %1244 = vmatprep.subr.bf16.mxu0 %v877
    %1245 = vmatpush1.bf16.msra.mxu0 %v876
    %1246 = vmatprep.subr.bf16.mxu0 %v873
    %1247 = vmatpush1.bf16.msra.mxu0 %v872
    %1248 = vmatprep.subr.bf16.mxu0 %v869
    %1249 = vmatpush1.bf16.msra.mxu0 %v868
    %1250 = vmatprep.subr.bf16.mxu0 %v865
    %1251 = vmatpush1.bf16.msra.mxu0 %v864
    %1252 = vmatprep.subr.bf16.mxu0 %v861
    %1253 = vmatpush1.bf16.msra.mxu0 %v860
    %1254 = vmatprep.subr.bf16.mxu0 %v857
    %1255 = vmatpush1.bf16.msra.mxu0 %v856
    %1256 = vmatprep.subr.bf16.mxu0 %v853
    %1257 = vmatpush1.bf16.msra.mxu0 %v852
    %1258 = vmatprep.subr.bf16.mxu0 %v849
    %1259 = vmatpush1.bf16.msra.mxu0 %v848
    %1260 = vmatprep.subr.bf16.mxu0 %v909
    %1261 = vmatpush2.bf16.msra.mxu0 %v908
    %1262 = vmatprep.subr.bf16.mxu0 %v905
    %1263 = vmatpush2.bf16.msra.mxu0 %v904
    %1264 = vmatprep.subr.bf16.mxu0 %v901
    %1265 = vmatpush2.bf16.msra.mxu0 %v900
    %1266 = vmatprep.subr.bf16.mxu0 %v897
    %1267 = vmatpush2.bf16.msra.mxu0 %v896
    %1268 = vmatprep.subr.bf16.mxu0 %v893
    %1269 = vmatpush2.bf16.msra.mxu0 %v892
    %1270 = vmatprep.subr.bf16.mxu0 %v889
    %1271 = vmatpush2.bf16.msra.mxu0 %v888
    %1272 = vmatprep.subr.bf16.mxu0 %v885
    %1273 = vmatpush2.bf16.msra.mxu0 %v884
    %1274 = vmatprep.subr.bf16.mxu0 %v881
    %1275 = vmatpush2.bf16.msra.mxu0 %v880
    %1276 = vmatprep.mubr.bf16.mxu0 %v36
    %1277 = vmatmul.mubr.bf16.gmra.mxu0 %v35
    %v1278 = vpop.f32.mrf.mxu0
    %v1279 = vadd.f32 %v243, %v1278
    %v1280 = vpop.f32.mrf.mxu0
    %v1281 = vadd.f32 %v247, %v1280
    %v1282 = vpop.f32.mrf.mxu0
    %v1283 = vpop.f32.mrf.mxu0
    %1284 = vdwg.mxu0
    %1285 = vmatprep.subr.bf16.mxu0 %v941
    %1286 = vmatpush1.bf16.msra.mxu0 %v940
    %1287 = vmatprep.subr.bf16.mxu0 %v937
    %1288 = vmatpush1.bf16.msra.mxu0 %v936
    %1289 = vmatprep.subr.bf16.mxu0 %v933
    %1290 = vmatpush1.bf16.msra.mxu0 %v932
    %1291 = vmatprep.subr.bf16.mxu0 %v929
    %1292 = vmatpush1.bf16.msra.mxu0 %v928
    %1293 = vmatprep.subr.bf16.mxu0 %v925
    %1294 = vmatpush1.bf16.msra.mxu0 %v924
    %1295 = vmatprep.subr.bf16.mxu0 %v921
    %1296 = vmatpush1.bf16.msra.mxu0 %v920
    %1297 = vmatprep.subr.bf16.mxu0 %v917
    %1298 = vmatpush1.bf16.msra.mxu0 %v916
    %1299 = vmatprep.subr.bf16.mxu0 %v913
    %1300 = vmatpush1.bf16.msra.mxu0 %v912
    %1301 = vmatprep.subr.bf16.mxu0 %v973
    %1302 = vmatpush2.bf16.msra.mxu0 %v972
    %1303 = vmatprep.subr.bf16.mxu0 %v969
    %1304 = vmatpush2.bf16.msra.mxu0 %v968
    %1305 = vmatprep.subr.bf16.mxu0 %v965
    %1306 = vmatpush2.bf16.msra.mxu0 %v964
    %1307 = vmatprep.subr.bf16.mxu0 %v961
    %1308 = vmatpush2.bf16.msra.mxu0 %v960
    %1309 = vmatprep.subr.bf16.mxu0 %v957
    %1310 = vmatpush2.bf16.msra.mxu0 %v956
    %1311 = vmatprep.subr.bf16.mxu0 %v953
    %1312 = vmatpush2.bf16.msra.mxu0 %v952
    %1313 = vmatprep.subr.bf16.mxu0 %v949
    %1314 = vmatpush2.bf16.msra.mxu0 %v948
    %1315 = vmatprep.subr.bf16.mxu0 %v945
    %1316 = vmatpush2.bf16.msra.mxu0 %v944
    %1317 = vmatprep.mubr.bf16.mxu0 %v38
    %1318 = vmatmul.mubr.bf16.gmra.mxu0 %v37
    %v1319 = vpop.f32.mrf.mxu0
    %v1320 = vadd.f32 %v1279, %v1319
    %v1321 = vpop.f32.mrf.mxu0
    %v1322 = vadd.f32 %v1281, %v1321
    %v1323 = vpop.f32.mrf.mxu0
    %v1324 = vpop.f32.mrf.mxu0
    %1325 = vdwg.mxu0
    %1326 = vmatprep.subr.bf16.mxu0 %v1005
    %1327 = vmatpush1.bf16.msra.mxu0 %v1004
    %1328 = vmatprep.subr.bf16.mxu0 %v1001
    %1329 = vmatpush1.bf16.msra.mxu0 %v1000
    %1330 = vmatprep.subr.bf16.mxu0 %v997
    %1331 = vmatpush1.bf16.msra.mxu0 %v996
    %1332 = vmatprep.subr.bf16.mxu0 %v993
    %1333 = vmatpush1.bf16.msra.mxu0 %v992
    %1334 = vmatprep.subr.bf16.mxu0 %v989
    %1335 = vmatpush1.bf16.msra.mxu0 %v988
    %1336 = vmatprep.subr.bf16.mxu0 %v985
    %1337 = vmatpush1.bf16.msra.mxu0 %v984
    %1338 = vmatprep.subr.bf16.mxu0 %v981
    %1339 = vmatpush1.bf16.msra.mxu0 %v980
    %1340 = vmatprep.subr.bf16.mxu0 %v977
    %1341 = vmatpush1.bf16.msra.mxu0 %v976
    %1342 = vmatprep.subr.bf16.mxu0 %v1037
    %1343 = vmatpush2.bf16.msra.mxu0 %v1036
    %1344 = vmatprep.subr.bf16.mxu0 %v1033
    %1345 = vmatpush2.bf16.msra.mxu0 %v1032
    %1346 = vmatprep.subr.bf16.mxu0 %v1029
    %1347 = vmatpush2.bf16.msra.mxu0 %v1028
    %1348 = vmatprep.subr.bf16.mxu0 %v1025
    %1349 = vmatpush2.bf16.msra.mxu0 %v1024
    %1350 = vmatprep.subr.bf16.mxu0 %v1021
    %1351 = vmatpush2.bf16.msra.mxu0 %v1020
    %1352 = vmatprep.subr.bf16.mxu0 %v1017
    %1353 = vmatpush2.bf16.msra.mxu0 %v1016
    %1354 = vmatprep.subr.bf16.mxu0 %v1013
    %1355 = vmatpush2.bf16.msra.mxu0 %v1012
    %1356 = vmatprep.subr.bf16.mxu0 %v1009
    %1357 = vmatpush2.bf16.msra.mxu0 %v1008
    %1358 = vmatprep.mubr.bf16.mxu0 %v40
    %1359 = vmatmul.mubr.bf16.gmra.mxu0 %v39
    %v1360 = vpop.f32.mrf.mxu0
    %v1361 = vadd.f32 %v1320, %v1360
    %v1362 = vpop.f32.mrf.mxu0
    %v1363 = vadd.f32 %v1322, %v1362
    %v1364 = vpop.f32.mrf.mxu0
    %v1365 = vpop.f32.mrf.mxu0
    %1366 = vdwg.mxu0
    %1367 = vmatprep.subr.bf16.mxu0 0
    %1368 = vmatpush1.bf16.msra.mxu0 0
    %1369 = vmatprep.subr.bf16.mxu0 0
    %1370 = vmatpush1.bf16.msra.mxu0 0
    %1371 = vmatprep.subr.bf16.mxu0 0
    %1372 = vmatpush1.bf16.msra.mxu0 0
    %1373 = vmatprep.subr.bf16.mxu0 0
    %1374 = vmatpush1.bf16.msra.mxu0 0
    %1375 = vmatprep.subr.bf16.mxu0 0
    %1376 = vmatpush1.bf16.msra.mxu0 0
    %1377 = vmatprep.subr.bf16.mxu0 0
    %1378 = vmatpush1.bf16.msra.mxu0 0
    %1379 = vmatprep.subr.bf16.mxu0 0
    %1380 = vmatpush1.bf16.msra.mxu0 0
    %1381 = vmatprep.subr.bf16.mxu0 %v1041
    %1382 = vmatpush1.bf16.msra.mxu0 %v1040
    %1383 = vmatprep.subr.bf16.mxu0 0
    %1384 = vmatpush2.bf16.msra.mxu0 0
    %1385 = vmatprep.subr.bf16.mxu0 0
    %1386 = vmatpush2.bf16.msra.mxu0 0
    %1387 = vmatprep.subr.bf16.mxu0 0
    %1388 = vmatpush2.bf16.msra.mxu0 0
    %1389 = vmatprep.subr.bf16.mxu0 0
    %1390 = vmatpush2.bf16.msra.mxu0 0
    %1391 = vmatprep.subr.bf16.mxu0 0
    %1392 = vmatpush2.bf16.msra.mxu0 0
    %1393 = vmatprep.subr.bf16.mxu0 0
    %1394 = vmatpush2.bf16.msra.mxu0 0
    %1395 = vmatprep.subr.bf16.mxu0 0
    %1396 = vmatpush2.bf16.msra.mxu0 0
    %1397 = vmatprep.subr.bf16.mxu0 0
    %1398 = vmatpush2.bf16.msra.mxu0 0
    %1399 = vmatprep.mubr.bf16.mxu0 0
    %1400 = vmatmul.mubr.bf16.gmra.mxu0 %v1242
    %v1401 = vpop.f32.mrf.mxu0
    %v1402 = vadd.f32 %v1361, %v1401
    %v1403 = vpop.f32.mrf.mxu0
    %v1404 = vadd.f32 %v1363, %v1403
    %v1405 = vpop.f32.mrf.mxu0
    %v1406 = vpop.f32.mrf.mxu0
    %1407 = vdwg.mxu0
    %1408 = vmatprep.subr.bf16.mxu0 %v879
    %1409 = vmatpush1.bf16.msra.mxu0 %v878
    %1410 = vmatprep.subr.bf16.mxu0 %v875
    %1411 = vmatpush1.bf16.msra.mxu0 %v874
    %1412 = vmatprep.subr.bf16.mxu0 %v871
    %1413 = vmatpush1.bf16.msra.mxu0 %v870
    %1414 = vmatprep.subr.bf16.mxu0 %v867
    %1415 = vmatpush1.bf16.msra.mxu0 %v866
    %1416 = vmatprep.subr.bf16.mxu0 %v863
    %1417 = vmatpush1.bf16.msra.mxu0 %v862
    %1418 = vmatprep.subr.bf16.mxu0 %v859
    %1419 = vmatpush1.bf16.msra.mxu0 %v858
    %1420 = vmatprep.subr.bf16.mxu0 %v855
    %1421 = vmatpush1.bf16.msra.mxu0 %v854
    %1422 = vmatprep.subr.bf16.mxu0 %v851
    %1423 = vmatpush1.bf16.msra.mxu0 %v850
    %1424 = vmatprep.subr.bf16.mxu0 %v911
    %1425 = vmatpush2.bf16.msra.mxu0 %v910
    %1426 = vmatprep.subr.bf16.mxu0 %v907
    %1427 = vmatpush2.bf16.msra.mxu0 %v906
    %1428 = vmatprep.subr.bf16.mxu0 %v903
    %1429 = vmatpush2.bf16.msra.mxu0 %v902
    %1430 = vmatprep.subr.bf16.mxu0 %v899
    %1431 = vmatpush2.bf16.msra.mxu0 %v898
    %1432 = vmatprep.subr.bf16.mxu0 %v895
    %1433 = vmatpush2.bf16.msra.mxu0 %v894
    %1434 = vmatprep.subr.bf16.mxu0 %v891
    %1435 = vmatpush2.bf16.msra.mxu0 %v890
    %1436 = vmatprep.subr.bf16.mxu0 %v887
    %1437 = vmatpush2.bf16.msra.mxu0 %v886
    %1438 = vmatprep.subr.bf16.mxu0 %v883
    %1439 = vmatpush2.bf16.msra.mxu0 %v882
    %1440 = vmatprep.mubr.bf16.mxu0 %v36
    %1441 = vmatmul.mubr.bf16.gmra.mxu0 %v35
    %v1442 = vpop.f32.mrf.mxu0
    %v1443 = vadd.f32 %v251, %v1442
    %v1444 = vpop.f32.mrf.mxu0
    %v1445 = vadd.f32 %v255, %v1444
    %v1446 = vpop.f32.mrf.mxu0
    %v1447 = vpop.f32.mrf.mxu0
    %1448 = vdwg.mxu0
    %1449 = vmatprep.subr.bf16.mxu0 %v943
    %1450 = vmatpush1.bf16.msra.mxu0 %v942
    %1451 = vmatprep.subr.bf16.mxu0 %v939
    %1452 = vmatpush1.bf16.msra.mxu0 %v938
    %1453 = vmatprep.subr.bf16.mxu0 %v935
    %1454 = vmatpush1.bf16.msra.mxu0 %v934
    %1455 = vmatprep.subr.bf16.mxu0 %v931
    %1456 = vmatpush1.bf16.msra.mxu0 %v930
    %1457 = vmatprep.subr.bf16.mxu0 %v927
    %1458 = vmatpush1.bf16.msra.mxu0 %v926
    %1459 = vmatprep.subr.bf16.mxu0 %v923
    %1460 = vmatpush1.bf16.msra.mxu0 %v922
    %1461 = vmatprep.subr.bf16.mxu0 %v919
    %1462 = vmatpush1.bf16.msra.mxu0 %v918
    %1463 = vmatprep.subr.bf16.mxu0 %v915
    %1464 = vmatpush1.bf16.msra.mxu0 %v914
    %1465 = vmatprep.subr.bf16.mxu0 %v975
    %1466 = vmatpush2.bf16.msra.mxu0 %v974
    %1467 = vmatprep.subr.bf16.mxu0 %v971
    %1468 = vmatpush2.bf16.msra.mxu0 %v970
    %1469 = vmatprep.subr.bf16.mxu0 %v967
    %1470 = vmatpush2.bf16.msra.mxu0 %v966
    %1471 = vmatprep.subr.bf16.mxu0 %v963
    %1472 = vmatpush2.bf16.msra.mxu0 %v962
    %1473 = vmatprep.subr.bf16.mxu0 %v959
    %1474 = vmatpush2.bf16.msra.mxu0 %v958
    %1475 = vmatprep.subr.bf16.mxu0 %v955
    %1476 = vmatpush2.bf16.msra.mxu0 %v954
    %1477 = vmatprep.subr.bf16.mxu0 %v951
    %1478 = vmatpush2.bf16.msra.mxu0 %v950
    %1479 = vmatprep.subr.bf16.mxu0 %v947
    %1480 = vmatpush2.bf16.msra.mxu0 %v946
    %1481 = vmatprep.mubr.bf16.mxu0 %v38
    %1482 = vmatmul.mubr.bf16.gmra.mxu0 %v37
    %v1483 = vpop.f32.mrf.mxu0
    %v1484 = vadd.f32 %v1443, %v1483
    %v1485 = vpop.f32.mrf.mxu0
    %v1486 = vadd.f32 %v1445, %v1485
    %v1487 = vpop.f32.mrf.mxu0
    %v1488 = vpop.f32.mrf.mxu0
    %1489 = vdwg.mxu0
    %1490 = vmatprep.subr.bf16.mxu0 %v1007
    %1491 = vmatpush1.bf16.msra.mxu0 %v1006
    %1492 = vmatprep.subr.bf16.mxu0 %v1003
    %1493 = vmatpush1.bf16.msra.mxu0 %v1002
    %1494 = vmatprep.subr.bf16.mxu0 %v999
    %1495 = vmatpush1.bf16.msra.mxu0 %v998
    %1496 = vmatprep.subr.bf16.mxu0 %v995
    %1497 = vmatpush1.bf16.msra.mxu0 %v994
    %1498 = vmatprep.subr.bf16.mxu0 %v991
    %1499 = vmatpush1.bf16.msra.mxu0 %v990
    %1500 = vmatprep.subr.bf16.mxu0 %v987
    %1501 = vmatpush1.bf16.msra.mxu0 %v986
    %1502 = vmatprep.subr.bf16.mxu0 %v983
    %1503 = vmatpush1.bf16.msra.mxu0 %v982
    %1504 = vmatprep.subr.bf16.mxu0 %v979
    %1505 = vmatpush1.bf16.msra.mxu0 %v978
    %1506 = vmatprep.subr.bf16.mxu0 %v1039
    %1507 = vmatpush2.bf16.msra.mxu0 %v1038
    %1508 = vmatprep.subr.bf16.mxu0 %v1035
    %1509 = vmatpush2.bf16.msra.mxu0 %v1034
    %1510 = vmatprep.subr.bf16.mxu0 %v1031
    %1511 = vmatpush2.bf16.msra.mxu0 %v1030
    %1512 = vmatprep.subr.bf16.mxu0 %v1027
    %1513 = vmatpush2.bf16.msra.mxu0 %v1026
    %1514 = vmatprep.subr.bf16.mxu0 %v1023
    %1515 = vmatpush2.bf16.msra.mxu0 %v1022
    %1516 = vmatprep.subr.bf16.mxu0 %v1019
    %1517 = vmatpush2.bf16.msra.mxu0 %v1018
    %1518 = vmatprep.subr.bf16.mxu0 %v1015
    %1519 = vmatpush2.bf16.msra.mxu0 %v1014
    %1520 = vmatprep.subr.bf16.mxu0 %v1011
    %1521 = vmatpush2.bf16.msra.mxu0 %v1010
    %1522 = vmatprep.mubr.bf16.mxu0 %v40
    %1523 = vmatmul.mubr.bf16.gmra.mxu0 %v39
    %v1524 = vpop.f32.mrf.mxu0
    %v1525 = vadd.f32 %v1484, %v1524
    %v1526 = vpop.f32.mrf.mxu0
    %v1527 = vadd.f32 %v1486, %v1526
    %v1528 = vpop.f32.mrf.mxu0
    %v1529 = vpop.f32.mrf.mxu0
    %1530 = vdwg.mxu0
    %1531 = vmatprep.subr.bf16.mxu0 0
    %1532 = vmatpush1.bf16.msra.mxu0 0
    %1533 = vmatprep.subr.bf16.mxu0 0
    %1534 = vmatpush1.bf16.msra.mxu0 0
    %1535 = vmatprep.subr.bf16.mxu0 0
    %1536 = vmatpush1.bf16.msra.mxu0 0
    %1537 = vmatprep.subr.bf16.mxu0 0
    %1538 = vmatpush1.bf16.msra.mxu0 0
    %1539 = vmatprep.subr.bf16.mxu0 0
    %1540 = vmatpush1.bf16.msra.mxu0 0
    %1541 = vmatprep.subr.bf16.mxu0 0
    %1542 = vmatpush1.bf16.msra.mxu0 0
    %1543 = vmatprep.subr.bf16.mxu0 0
    %1544 = vmatpush1.bf16.msra.mxu0 0
    %1545 = vmatprep.subr.bf16.mxu0 %v1043
    %1546 = vmatpush1.bf16.msra.mxu0 %v1042
    %1547 = vmatprep.subr.bf16.mxu0 0
    %1548 = vmatpush2.bf16.msra.mxu0 0
    %1549 = vmatprep.subr.bf16.mxu0 0
    %1550 = vmatpush2.bf16.msra.mxu0 0
    %1551 = vmatprep.subr.bf16.mxu0 0
    %1552 = vmatpush2.bf16.msra.mxu0 0
    %1553 = vmatprep.subr.bf16.mxu0 0
    %1554 = vmatpush2.bf16.msra.mxu0 0
    %1555 = vmatprep.subr.bf16.mxu0 0
    %1556 = vmatpush2.bf16.msra.mxu0 0
    %1557 = vmatprep.subr.bf16.mxu0 0
    %1558 = vmatpush2.bf16.msra.mxu0 0
    %1559 = vmatprep.subr.bf16.mxu0 0
    %1560 = vmatpush2.bf16.msra.mxu0 0
    %1561 = vmatprep.subr.bf16.mxu0 0
    %1562 = vmatpush2.bf16.msra.mxu0 0
    %1563 = vmatprep.mubr.bf16.mxu0 0
    %1564 = vmatmul.mubr.bf16.gmra.mxu0 %v1242
    %v1565 = vpop.f32.mrf.mxu0
    %v1566 = vadd.f32 %v1525, %v1565
    %v1567 = vpop.f32.mrf.mxu0
    %v1568 = vadd.f32 %v1527, %v1567
    %v1569 = vpop.f32.mrf.mxu0
    %v1570 = vpop.f32.mrf.mxu0
    %1571 = vdwg.mxu0
    %v1572 = vmax.f32 %v1402, 0.0
    %v1573 = vmax.f32 %v1404, 0.0
    %v1574 = vmax.f32 %v1566, 0.0
    %v1575 = vmax.f32 %v1568, 0.0
    %v1576 = vpack.c.bf16 %v1572, %v1572
    %v1577 = vpack.c.bf16 %v1573, %v1573
    %v1578 = vpack.c.bf16 %v1574, %v1574
    %v1579 = vpack.c.bf16 %v1575, %v1575
    %v1580 = vld [vmem:[%s3] sm:$0xff]
    %v1581 = vld [vmem:[%s3 + $0x8] sm:$0xff]
    %v1582 = vld [vmem:[%s3 + $0x10] sm:$0xff]
    %v1583 = vld [vmem:[%s3 + $0x18] sm:$0xff]
    %v1584 = vld [vmem:[%s3 + $0x20] sm:$0xff]
    %v1585 = vld [vmem:[%s3 + $0x28] sm:$0xff]
    %v1586 = vld [vmem:[%s3 + $0x30] sm:$0xff]
    %v1587 = vld [vmem:[%s3 + $0x38] sm:$0xff]
    %v1588 = vld [vmem:[%s3 + $0x40] sm:$0xff]
    %v1589 = vld [vmem:[%s3 + $0x48] sm:$0xff]
    %v1590 = vld [vmem:[%s3 + $0x50] sm:$0xff]
    %v1591 = vld [vmem:[%s3 + $0x58] sm:$0xff]
    %v1592 = vld [vmem:[%s3 + $0x60] sm:$0xff]
    %v1593 = vld [vmem:[%s3 + $0x68] sm:$0xff]
    %v1594 = vld [vmem:[%s3 + $0x70] sm:$0xff]
    %v1595 = vld [vmem:[%s3 + $0x78] sm:$0xff]
    %v1596 = vld [vmem:[%s3 + $0x80] sm:$0xff]
    %v1597 = vld [vmem:[%s3 + $0x88] sm:$0xff]
    %v1598 = vld [vmem:[%s3 + $0x90] sm:$0xff]
    %v1599 = vld [vmem:[%s3 + $0x98] sm:$0xff]
    %v1600 = vld [vmem:[%s3 + $0xa0] sm:$0xff]
    %v1601 = vld [vmem:[%s3 + $0xa8] sm:$0xff]
    %v1602 = vld [vmem:[%s3 + $0xb0] sm:$0xff]
    %v1603 = vld [vmem:[%s3 + $0xb8] sm:$0xff]
    %v1604 = vld [vmem:[%s3 + $0xc0] sm:$0xff]
    %v1605 = vld [vmem:[%s3 + $0xc8] sm:$0xff]
    %v1606 = vld [vmem:[%s3 + $0xd0] sm:$0xff]
    %v1607 = vld [vmem:[%s3 + $0xd8] sm:$0xff]
    %v1608 = vld [vmem:[%s3 + $0xe0] sm:$0xff]
    %v1609 = vld [vmem:[%s3 + $0xe8] sm:$0xff]
    %v1610 = vld [vmem:[%s3 + $0xf0] sm:$0xff]
    %v1611 = vld [vmem:[%s3 + $0xf8] sm:$0xff]
    %v1612 = vld [vmem:[%s3 + $0x100] sm:$0xff]
    %v1613 = vld [vmem:[%s3 + $0x108] sm:$0xff]
    %v1614 = vld [vmem:[%s3 + $0x110] sm:$0xff]
    %v1615 = vld [vmem:[%s3 + $0x118] sm:$0xff]
    %v1616 = vld [vmem:[%s3 + $0x120] sm:$0xff]
    %v1617 = vld [vmem:[%s3 + $0x128] sm:$0xff]
    %v1618 = vld [vmem:[%s3 + $0x130] sm:$0xff]
    %v1619 = vld [vmem:[%s3 + $0x138] sm:$0xff]
    %v1620 = vld [vmem:[%s3 + $0x140] sm:$0xff]
    %v1621 = vld [vmem:[%s3 + $0x148] sm:$0xff]
    %v1622 = vld [vmem:[%s3 + $0x150] sm:$0xff]
    %v1623 = vld [vmem:[%s3 + $0x158] sm:$0xff]
    %v1624 = vld [vmem:[%s3 + $0x160] sm:$0xff]
    %v1625 = vld [vmem:[%s3 + $0x168] sm:$0xff]
    %v1626 = vld [vmem:[%s3 + $0x170] sm:$0xff]
    %v1627 = vld [vmem:[%s3 + $0x178] sm:$0xff]
    %v1628 = vld [vmem:[%s3 + $0x180] sm:$0xff]
    %v1629 = vld [vmem:[%s3 + $0x188] sm:$0xff]
    %v1630 = vld [vmem:[%s3 + $0x190] sm:$0xff]
    %v1631 = vld [vmem:[%s3 + $0x198] sm:$0xff]
    %v1632 = vld [vmem:[%s3 + $0x1a0] sm:$0xff]
    %v1633 = vld [vmem:[%s3 + $0x1a8] sm:$0xff]
    %v1634 = vld [vmem:[%s3 + $0x1b0] sm:$0xff]
    %v1635 = vld [vmem:[%s3 + $0x1b8] sm:$0xff]
    %v1636 = vld [vmem:[%s3 + $0x1c0] sm:$0xff]
    %v1637 = vld [vmem:[%s3 + $0x1c8] sm:$0xff]
    %v1638 = vld [vmem:[%s3 + $0x1d0] sm:$0xff]
    %v1639 = vld [vmem:[%s3 + $0x1d8] sm:$0xff]
    %v1640 = vld [vmem:[%s3 + $0x1e0] sm:$0xff]
    %v1641 = vld [vmem:[%s3 + $0x1e8] sm:$0xff]
    %v1642 = vld [vmem:[%s3 + $0x1f0] sm:$0xff]
    %v1643 = vld [vmem:[%s3 + $0x1f8] sm:$0xff]
    %v1644 = vld [vmem:[%s3 + $0x200] sm:$0xff]
    %v1645 = vld [vmem:[%s3 + $0x208] sm:$0xff]
    %v1646 = vld [vmem:[%s3 + $0x210] sm:$0xff]
    %v1647 = vld [vmem:[%s3 + $0x218] sm:$0xff]
    %v1648 = vld [vmem:[%s3 + $0x220] sm:$0xff]
    %v1649 = vld [vmem:[%s3 + $0x228] sm:$0xff]
    %v1650 = vld [vmem:[%s3 + $0x230] sm:$0xff]
    %v1651 = vld [vmem:[%s3 + $0x238] sm:$0xff]
    %v1652 = vld [vmem:[%s3 + $0x240] sm:$0xff]
    %v1653 = vld [vmem:[%s3 + $0x248] sm:$0xff]
    %v1654 = vld [vmem:[%s3 + $0x250] sm:$0xff]
    %v1655 = vld [vmem:[%s3 + $0x258] sm:$0xff]
    %v1656 = vld [vmem:[%s3 + $0x260] sm:$0xff]
    %v1657 = vld [vmem:[%s3 + $0x268] sm:$0xff]
    %v1658 = vld [vmem:[%s3 + $0x270] sm:$0xff]
    %v1659 = vld [vmem:[%s3 + $0x278] sm:$0xff]
    %v1660 = vld [vmem:[%s3 + $0x280] sm:$0xff]
    %v1661 = vld [vmem:[%s3 + $0x288] sm:$0xff]
    %v1662 = vld [vmem:[%s3 + $0x290] sm:$0xff]
    %v1663 = vld [vmem:[%s3 + $0x298] sm:$0xff]
    %v1664 = vld [vmem:[%s3 + $0x2a0] sm:$0xff]
    %v1665 = vld [vmem:[%s3 + $0x2a8] sm:$0xff]
    %v1666 = vld [vmem:[%s3 + $0x2b0] sm:$0xff]
    %v1667 = vld [vmem:[%s3 + $0x2b8] sm:$0xff]
    %v1668 = vld [vmem:[%s3 + $0x2c0] sm:$0xff]
    %v1669 = vld [vmem:[%s3 + $0x2c8] sm:$0xff]
    %v1670 = vld [vmem:[%s3 + $0x2d0] sm:$0xff]
    %v1671 = vld [vmem:[%s3 + $0x2d8] sm:$0xff]
    %v1672 = vld [vmem:[%s3 + $0x2e0] sm:$0xff]
    %v1673 = vld [vmem:[%s3 + $0x2e8] sm:$0xff]
    %v1674 = vld [vmem:[%s3 + $0x2f0] sm:$0xff]
    %v1675 = vld [vmem:[%s3 + $0x2f8] sm:$0xff]
    %v1676 = vld [vmem:[%s3 + $0x300] sm:$0xff]
    %v1677 = vld [vmem:[%s3 + $0x308] sm:$0xff]
    %v1678 = vld [vmem:[%s3 + $0x310] sm:$0xff]
    %v1679 = vld [vmem:[%s3 + $0x318] sm:$0xff]
    %v1680 = vld [vmem:[%s3 + $0x320] sm:$0xff]
    %v1681 = vld [vmem:[%s3 + $0x328] sm:$0xff]
    %v1682 = vld [vmem:[%s3 + $0x330] sm:$0xff]
    %v1683 = vld [vmem:[%s3 + $0x338] sm:$0xff]
    %v1684 = vld [vmem:[%s3 + $0x340] sm:$0xff]
    %v1685 = vld [vmem:[%s3 + $0x348] sm:$0xff]
    %v1686 = vld [vmem:[%s3 + $0x350] sm:$0xff]
    %v1687 = vld [vmem:[%s3 + $0x358] sm:$0xff]
    %v1688 = vld [vmem:[%s3 + $0x360] sm:$0xff]
    %v1689 = vld [vmem:[%s3 + $0x368] sm:$0xff]
    %v1690 = vld [vmem:[%s3 + $0x370] sm:$0xff]
    %v1691 = vld [vmem:[%s3 + $0x378] sm:$0xff]
    %v1692 = vld [vmem:[%s3 + $0x380] sm:$0xff]
    %v1693 = vld [vmem:[%s3 + $0x388] sm:$0xff]
    %v1694 = vld [vmem:[%s3 + $0x390] sm:$0xff]
    %v1695 = vld [vmem:[%s3 + $0x398] sm:$0xff]
    %v1696 = vld [vmem:[%s3 + $0x3a0] sm:$0xff]
    %v1697 = vld [vmem:[%s3 + $0x3a8] sm:$0xff]
    %v1698 = vld [vmem:[%s3 + $0x3b0] sm:$0xff]
    %v1699 = vld [vmem:[%s3 + $0x3b8] sm:$0xff]
    %v1700 = vld [vmem:[%s3 + $0x3c0] sm:$0xff]
    %v1701 = vld [vmem:[%s3 + $0x3c8] sm:$0xff]
    %v1702 = vld [vmem:[%s3 + $0x3d0] sm:$0xff]
    %v1703 = vld [vmem:[%s3 + $0x3d8] sm:$0xff]
    %v1704 = vld [vmem:[%s3 + $0x3e0] sm:$0xff]
    %v1705 = vld [vmem:[%s3 + $0x3e8] sm:$0xff]
    %v1706 = vld [vmem:[%s3 + $0x3f0] sm:$0xff]
    %v1707 = vld [vmem:[%s3 + $0x3f8] sm:$0xff]
    %v1708 = vld [vmem:[%s4] sm:$0xf]
    %v1710 = vlaneseq
    %v1711 = vshrl.u32 %v1710, 7
    %v1712 = vsub.s32 0, %v1711
    %v1713 = vrot.slane %v1708, %v1712
    %v1714 = vlaneseq
    %v1715 = vshrl.u32 %v1714, 7
    %v1716 = vsub.s32 1, %v1715
    %v1717 = vrot.slane %v1708, %v1716
    %v1718 = vlaneseq
    %v1719 = vshrl.u32 %v1718, 7
    %v1720 = vsub.s32 2, %v1719
    %v1721 = vrot.slane %v1708, %v1720
    %v1722 = vlaneseq
    %v1723 = vshrl.u32 %v1722, 7
    %v1724 = vsub.s32 3, %v1723
    %v1725 = vrot.slane %v1708, %v1724
    %v1858 = vunpack.c.l.b16 %v1580
    %v1859 = vunpack.c.h.b16 %v1580
    %v1860 = vunpack.c.l.b16 %v1581
    %v1861 = vunpack.c.h.b16 %v1581
    %v1862 = vunpack.c.l.b16 %v1582
    %v1863 = vunpack.c.h.b16 %v1582
    %v1864 = vunpack.c.l.b16 %v1583
    %v1865 = vunpack.c.h.b16 %v1583
    %v1866 = vunpack.c.l.b16 %v1584
    %v1867 = vunpack.c.h.b16 %v1584
    %v1868 = vunpack.c.l.b16 %v1585
    %v1869 = vunpack.c.h.b16 %v1585
    %v1870 = vunpack.c.l.b16 %v1586
    %v1871 = vunpack.c.h.b16 %v1586
    %v1872 = vunpack.c.l.b16 %v1587
    %v1873 = vunpack.c.h.b16 %v1587
    %v1874 = vunpack.c.l.b16 %v1588
    %v1875 = vunpack.c.h.b16 %v1588
    %v1876 = vunpack.c.l.b16 %v1589
    %v1877 = vunpack.c.h.b16 %v1589
    %v1878 = vunpack.c.l.b16 %v1590
    %v1879 = vunpack.c.h.b16 %v1590
    %v1880 = vunpack.c.l.b16 %v1591
    %v1881 = vunpack.c.h.b16 %v1591
    %v1882 = vunpack.c.l.b16 %v1592
    %v1883 = vunpack.c.h.b16 %v1592
    %v1884 = vunpack.c.l.b16 %v1593
    %v1885 = vunpack.c.h.b16 %v1593
    %v1886 = vunpack.c.l.b16 %v1594
    %v1887 = vunpack.c.h.b16 %v1594
    %v1888 = vunpack.c.l.b16 %v1595
    %v1889 = vunpack.c.h.b16 %v1595
    %v1890 = vunpack.c.l.b16 %v1596
    %v1891 = vunpack.c.h.b16 %v1596
    %v1892 = vunpack.c.l.b16 %v1597
    %v1893 = vunpack.c.h.b16 %v1597
    %v1894 = vunpack.c.l.b16 %v1598
    %v1895 = vunpack.c.h.b16 %v1598
    %v1896 = vunpack.c.l.b16 %v1599
    %v1897 = vunpack.c.h.b16 %v1599
    %v1898 = vunpack.c.l.b16 %v1600
    %v1899 = vunpack.c.h.b16 %v1600
    %v1900 = vunpack.c.l.b16 %v1601
    %v1901 = vunpack.c.h.b16 %v1601
    %v1902 = vunpack.c.l.b16 %v1602
    %v1903 = vunpack.c.h.b16 %v1602
    %v1904 = vunpack.c.l.b16 %v1603
    %v1905 = vunpack.c.h.b16 %v1603
    %v1906 = vunpack.c.l.b16 %v1604
    %v1907 = vunpack.c.h.b16 %v1604
    %v1908 = vunpack.c.l.b16 %v1605
    %v1909 = vunpack.c.h.b16 %v1605
    %v1910 = vunpack.c.l.b16 %v1606
    %v1911 = vunpack.c.h.b16 %v1606
    %v1912 = vunpack.c.l.b16 %v1607
    %v1913 = vunpack.c.h.b16 %v1607
    %v1914 = vunpack.c.l.b16 %v1608
    %v1915 = vunpack.c.h.b16 %v1608
    %v1916 = vunpack.c.l.b16 %v1609
    %v1917 = vunpack.c.h.b16 %v1609
    %v1918 = vunpack.c.l.b16 %v1610
    %v1919 = vunpack.c.h.b16 %v1610
    %v1920 = vunpack.c.l.b16 %v1611
    %v1921 = vunpack.c.h.b16 %v1611
    %v1922 = vunpack.c.l.b16 %v1612
    %v1923 = vunpack.c.h.b16 %v1612
    %v1924 = vunpack.c.l.b16 %v1613
    %v1925 = vunpack.c.h.b16 %v1613
    %v1926 = vunpack.c.l.b16 %v1614
    %v1927 = vunpack.c.h.b16 %v1614
    %v1928 = vunpack.c.l.b16 %v1615
    %v1929 = vunpack.c.h.b16 %v1615
    %v1930 = vunpack.c.l.b16 %v1616
    %v1931 = vunpack.c.h.b16 %v1616
    %v1932 = vunpack.c.l.b16 %v1617
    %v1933 = vunpack.c.h.b16 %v1617
    %v1934 = vunpack.c.l.b16 %v1618
    %v1935 = vunpack.c.h.b16 %v1618
    %v1936 = vunpack.c.l.b16 %v1619
    %v1937 = vunpack.c.h.b16 %v1619
    %v1938 = vunpack.c.l.b16 %v1620
    %v1939 = vunpack.c.h.b16 %v1620
    %v1940 = vunpack.c.l.b16 %v1621
    %v1941 = vunpack.c.h.b16 %v1621
    %v1942 = vunpack.c.l.b16 %v1622
    %v1943 = vunpack.c.h.b16 %v1622
    %v1944 = vunpack.c.l.b16 %v1623
    %v1945 = vunpack.c.h.b16 %v1623
    %v1946 = vunpack.c.l.b16 %v1624
    %v1947 = vunpack.c.h.b16 %v1624
    %v1948 = vunpack.c.l.b16 %v1625
    %v1949 = vunpack.c.h.b16 %v1625
    %v1950 = vunpack.c.l.b16 %v1626
    %v1951 = vunpack.c.h.b16 %v1626
    %v1952 = vunpack.c.l.b16 %v1627
    %v1953 = vunpack.c.h.b16 %v1627
    %v1954 = vunpack.c.l.b16 %v1628
    %v1955 = vunpack.c.h.b16 %v1628
    %v1956 = vunpack.c.l.b16 %v1629
    %v1957 = vunpack.c.h.b16 %v1629
    %v1958 = vunpack.c.l.b16 %v1630
    %v1959 = vunpack.c.h.b16 %v1630
    %v1960 = vunpack.c.l.b16 %v1631
    %v1961 = vunpack.c.h.b16 %v1631
    %v1962 = vunpack.c.l.b16 %v1632
    %v1963 = vunpack.c.h.b16 %v1632
    %v1964 = vunpack.c.l.b16 %v1633
    %v1965 = vunpack.c.h.b16 %v1633
    %v1966 = vunpack.c.l.b16 %v1634
    %v1967 = vunpack.c.h.b16 %v1634
    %v1968 = vunpack.c.l.b16 %v1635
    %v1969 = vunpack.c.h.b16 %v1635
    %v1970 = vunpack.c.l.b16 %v1636
    %v1971 = vunpack.c.h.b16 %v1636
    %v1972 = vunpack.c.l.b16 %v1637
    %v1973 = vunpack.c.h.b16 %v1637
    %v1974 = vunpack.c.l.b16 %v1638
    %v1975 = vunpack.c.h.b16 %v1638
    %v1976 = vunpack.c.l.b16 %v1639
    %v1977 = vunpack.c.h.b16 %v1639
    %v1978 = vunpack.c.l.b16 %v1640
    %v1979 = vunpack.c.h.b16 %v1640
    %v1980 = vunpack.c.l.b16 %v1641
    %v1981 = vunpack.c.h.b16 %v1641
    %v1982 = vunpack.c.l.b16 %v1642
    %v1983 = vunpack.c.h.b16 %v1642
    %v1984 = vunpack.c.l.b16 %v1643
    %v1985 = vunpack.c.h.b16 %v1643
    %v1986 = vunpack.c.l.b16 %v1644
    %v1987 = vunpack.c.h.b16 %v1644
    %v1988 = vunpack.c.l.b16 %v1645
    %v1989 = vunpack.c.h.b16 %v1645
    %v1990 = vunpack.c.l.b16 %v1646
    %v1991 = vunpack.c.h.b16 %v1646
    %v1992 = vunpack.c.l.b16 %v1647
    %v1993 = vunpack.c.h.b16 %v1647
    %v1994 = vunpack.c.l.b16 %v1648
    %v1995 = vunpack.c.h.b16 %v1648
    %v1996 = vunpack.c.l.b16 %v1649
    %v1997 = vunpack.c.h.b16 %v1649
    %v1998 = vunpack.c.l.b16 %v1650
    %v1999 = vunpack.c.h.b16 %v1650
    %v2000 = vunpack.c.l.b16 %v1651
    %v2001 = vunpack.c.h.b16 %v1651
    %v2002 = vunpack.c.l.b16 %v1652
    %v2003 = vunpack.c.h.b16 %v1652
    %v2004 = vunpack.c.l.b16 %v1653
    %v2005 = vunpack.c.h.b16 %v1653
    %v2006 = vunpack.c.l.b16 %v1654
    %v2007 = vunpack.c.h.b16 %v1654
    %v2008 = vunpack.c.l.b16 %v1655
    %v2009 = vunpack.c.h.b16 %v1655
    %v2010 = vunpack.c.l.b16 %v1656
    %v2011 = vunpack.c.h.b16 %v1656
    %v2012 = vunpack.c.l.b16 %v1657
    %v2013 = vunpack.c.h.b16 %v1657
    %v2014 = vunpack.c.l.b16 %v1658
    %v2015 = vunpack.c.h.b16 %v1658
    %v2016 = vunpack.c.l.b16 %v1659
    %v2017 = vunpack.c.h.b16 %v1659
    %v2018 = vunpack.c.l.b16 %v1660
    %v2019 = vunpack.c.h.b16 %v1660
    %v2020 = vunpack.c.l.b16 %v1661
    %v2021 = vunpack.c.h.b16 %v1661
    %v2022 = vunpack.c.l.b16 %v1662
    %v2023 = vunpack.c.h.b16 %v1662
    %v2024 = vunpack.c.l.b16 %v1663
    %v2025 = vunpack.c.h.b16 %v1663
    %v2026 = vunpack.c.l.b16 %v1664
    %v2027 = vunpack.c.h.b16 %v1664
    %v2028 = vunpack.c.l.b16 %v1665
    %v2029 = vunpack.c.h.b16 %v1665
    %v2030 = vunpack.c.l.b16 %v1666
    %v2031 = vunpack.c.h.b16 %v1666
    %v2032 = vunpack.c.l.b16 %v1667
    %v2033 = vunpack.c.h.b16 %v1667
    %v2034 = vunpack.c.l.b16 %v1668
    %v2035 = vunpack.c.h.b16 %v1668
    %v2036 = vunpack.c.l.b16 %v1669
    %v2037 = vunpack.c.h.b16 %v1669
    %v2038 = vunpack.c.l.b16 %v1670
    %v2039 = vunpack.c.h.b16 %v1670
    %v2040 = vunpack.c.l.b16 %v1671
    %v2041 = vunpack.c.h.b16 %v1671
    %v2042 = vunpack.c.l.b16 %v1672
    %v2043 = vunpack.c.h.b16 %v1672
    %v2044 = vunpack.c.l.b16 %v1673
    %v2045 = vunpack.c.h.b16 %v1673
    %v2046 = vunpack.c.l.b16 %v1674
    %v2047 = vunpack.c.h.b16 %v1674
    %v2048 = vunpack.c.l.b16 %v1675
    %v2049 = vunpack.c.h.b16 %v1675
    %v2050 = vunpack.c.l.b16 %v1676
    %v2051 = vunpack.c.h.b16 %v1676
    %v2052 = vunpack.c.l.b16 %v1677
    %v2053 = vunpack.c.h.b16 %v1677
    %v2054 = vunpack.c.l.b16 %v1678
    %v2055 = vunpack.c.h.b16 %v1678
    %v2056 = vunpack.c.l.b16 %v1679
    %v2057 = vunpack.c.h.b16 %v1679
    %v2058 = vunpack.c.l.b16 %v1680
    %v2059 = vunpack.c.h.b16 %v1680
    %v2060 = vunpack.c.l.b16 %v1681
    %v2061 = vunpack.c.h.b16 %v1681
    %v2062 = vunpack.c.l.b16 %v1682
    %v2063 = vunpack.c.h.b16 %v1682
    %v2064 = vunpack.c.l.b16 %v1683
    %v2065 = vunpack.c.h.b16 %v1683
    %v2066 = vunpack.c.l.b16 %v1684
    %v2067 = vunpack.c.h.b16 %v1684
    %v2068 = vunpack.c.l.b16 %v1685
    %v2069 = vunpack.c.h.b16 %v1685
    %v2070 = vunpack.c.l.b16 %v1686
    %v2071 = vunpack.c.h.b16 %v1686
    %v2072 = vunpack.c.l.b16 %v1687
    %v2073 = vunpack.c.h.b16 %v1687
    %v2074 = vunpack.c.l.b16 %v1688
    %v2075 = vunpack.c.h.b16 %v1688
    %v2076 = vunpack.c.l.b16 %v1689
    %v2077 = vunpack.c.h.b16 %v1689
    %v2078 = vunpack.c.l.b16 %v1690
    %v2079 = vunpack.c.h.b16 %v1690
    %v2080 = vunpack.c.l.b16 %v1691
    %v2081 = vunpack.c.h.b16 %v1691
    %v2082 = vunpack.c.l.b16 %v1692
    %v2083 = vunpack.c.h.b16 %v1692
    %v2084 = vunpack.c.l.b16 %v1693
    %v2085 = vunpack.c.h.b16 %v1693
    %v2086 = vunpack.c.l.b16 %v1694
    %v2087 = vunpack.c.h.b16 %v1694
    %v2088 = vunpack.c.l.b16 %v1695
    %v2089 = vunpack.c.h.b16 %v1695
    %v2090 = vunpack.c.l.b16 %v1696
    %v2091 = vunpack.c.h.b16 %v1696
    %v2092 = vunpack.c.l.b16 %v1697
    %v2093 = vunpack.c.h.b16 %v1697
    %v2094 = vunpack.c.l.b16 %v1698
    %v2095 = vunpack.c.h.b16 %v1698
    %v2096 = vunpack.c.l.b16 %v1699
    %v2097 = vunpack.c.h.b16 %v1699
    %v2098 = vunpack.c.l.b16 %v1700
    %v2099 = vunpack.c.h.b16 %v1700
    %v2100 = vunpack.c.l.b16 %v1701
    %v2101 = vunpack.c.h.b16 %v1701
    %v2102 = vunpack.c.l.b16 %v1702
    %v2103 = vunpack.c.h.b16 %v1702
    %v2104 = vunpack.c.l.b16 %v1703
    %v2105 = vunpack.c.h.b16 %v1703
    %v2106 = vunpack.c.l.b16 %v1704
    %v2107 = vunpack.c.h.b16 %v1704
    %v2108 = vunpack.c.l.b16 %v1705
    %v2109 = vunpack.c.h.b16 %v1705
    %v2110 = vunpack.c.l.b16 %v1706
    %v2111 = vunpack.c.h.b16 %v1706
    %v2112 = vunpack.c.l.b16 %v1707
    %v2113 = vunpack.c.h.b16 %v1707
    %v2114 = vpack.c.b16 %v1862, %v1858
    %v2115 = vpack.c.b16 %v1863, %v1859
    %v2116 = vpack.c.b16 %v1864, %v1860
    %v2117 = vpack.c.b16 %v1865, %v1861
    %v2118 = vpack.c.b16 %v1870, %v1866
    %v2119 = vpack.c.b16 %v1871, %v1867
    %v2120 = vpack.c.b16 %v1872, %v1868
    %v2121 = vpack.c.b16 %v1873, %v1869
    %v2122 = vpack.c.b16 %v1878, %v1874
    %v2123 = vpack.c.b16 %v1879, %v1875
    %v2124 = vpack.c.b16 %v1880, %v1876
    %v2125 = vpack.c.b16 %v1881, %v1877
    %v2126 = vpack.c.b16 %v1886, %v1882
    %v2127 = vpack.c.b16 %v1887, %v1883
    %v2128 = vpack.c.b16 %v1888, %v1884
    %v2129 = vpack.c.b16 %v1889, %v1885
    %v2130 = vpack.c.b16 %v1894, %v1890
    %v2131 = vpack.c.b16 %v1895, %v1891
    %v2132 = vpack.c.b16 %v1896, %v1892
    %v2133 = vpack.c.b16 %v1897, %v1893
    %v2134 = vpack.c.b16 %v1902, %v1898
    %v2135 = vpack.c.b16 %v1903, %v1899
    %v2136 = vpack.c.b16 %v1904, %v1900
    %v2137 = vpack.c.b16 %v1905, %v1901
    %v2138 = vpack.c.b16 %v1910, %v1906
    %v2139 = vpack.c.b16 %v1911, %v1907
    %v2140 = vpack.c.b16 %v1912, %v1908
    %v2141 = vpack.c.b16 %v1913, %v1909
    %v2142 = vpack.c.b16 %v1918, %v1914
    %v2143 = vpack.c.b16 %v1919, %v1915
    %v2144 = vpack.c.b16 %v1920, %v1916
    %v2145 = vpack.c.b16 %v1921, %v1917
    %v2146 = vpack.c.b16 %v1926, %v1922
    %v2147 = vpack.c.b16 %v1927, %v1923
    %v2148 = vpack.c.b16 %v1928, %v1924
    %v2149 = vpack.c.b16 %v1929, %v1925
    %v2150 = vpack.c.b16 %v1934, %v1930
    %v2151 = vpack.c.b16 %v1935, %v1931
    %v2152 = vpack.c.b16 %v1936, %v1932
    %v2153 = vpack.c.b16 %v1937, %v1933
    %v2154 = vpack.c.b16 %v1942, %v1938
    %v2155 = vpack.c.b16 %v1943, %v1939
    %v2156 = vpack.c.b16 %v1944, %v1940
    %v2157 = vpack.c.b16 %v1945, %v1941
    %v2158 = vpack.c.b16 %v1950, %v1946
    %v2159 = vpack.c.b16 %v1951, %v1947
    %v2160 = vpack.c.b16 %v1952, %v1948
    %v2161 = vpack.c.b16 %v1953, %v1949
    %v2162 = vpack.c.b16 %v1958, %v1954
    %v2163 = vpack.c.b16 %v1959, %v1955
    %v2164 = vpack.c.b16 %v1960, %v1956
    %v2165 = vpack.c.b16 %v1961, %v1957
    %v2166 = vpack.c.b16 %v1966, %v1962
    %v2167 = vpack.c.b16 %v1967, %v1963
    %v2168 = vpack.c.b16 %v1968, %v1964
    %v2169 = vpack.c.b16 %v1969, %v1965
    %v2170 = vpack.c.b16 %v1974, %v1970
    %v2171 = vpack.c.b16 %v1975, %v1971
    %v2172 = vpack.c.b16 %v1976, %v1972
    %v2173 = vpack.c.b16 %v1977, %v1973
    %v2174 = vpack.c.b16 %v1982, %v1978
    %v2175 = vpack.c.b16 %v1983, %v1979
    %v2176 = vpack.c.b16 %v1984, %v1980
    %v2177 = vpack.c.b16 %v1985, %v1981
    %v2178 = vpack.c.b16 %v1990, %v1986
    %v2179 = vpack.c.b16 %v1991, %v1987
    %v2180 = vpack.c.b16 %v1992, %v1988
    %v2181 = vpack.c.b16 %v1993, %v1989
    %v2182 = vpack.c.b16 %v1998, %v1994
    %v2183 = vpack.c.b16 %v1999, %v1995
    %v2184 = vpack.c.b16 %v2000, %v1996
    %v2185 = vpack.c.b16 %v2001, %v1997
    %v2186 = vpack.c.b16 %v2006, %v2002
    %v2187 = vpack.c.b16 %v2007, %v2003
    %v2188 = vpack.c.b16 %v2008, %v2004
    %v2189 = vpack.c.b16 %v2009, %v2005
    %v2190 = vpack.c.b16 %v2014, %v2010
    %v2191 = vpack.c.b16 %v2015, %v2011
    %v2192 = vpack.c.b16 %v2016, %v2012
    %v2193 = vpack.c.b16 %v2017, %v2013
    %v2194 = vpack.c.b16 %v2022, %v2018
    %v2195 = vpack.c.b16 %v2023, %v2019
    %v2196 = vpack.c.b16 %v2024, %v2020
    %v2197 = vpack.c.b16 %v2025, %v2021
    %v2198 = vpack.c.b16 %v2030, %v2026
    %v2199 = vpack.c.b16 %v2031, %v2027
    %v2200 = vpack.c.b16 %v2032, %v2028
    %v2201 = vpack.c.b16 %v2033, %v2029
    %v2202 = vpack.c.b16 %v2038, %v2034
    %v2203 = vpack.c.b16 %v2039, %v2035
    %v2204 = vpack.c.b16 %v2040, %v2036
    %v2205 = vpack.c.b16 %v2041, %v2037
    %v2206 = vpack.c.b16 %v2046, %v2042
    %v2207 = vpack.c.b16 %v2047, %v2043
    %v2208 = vpack.c.b16 %v2048, %v2044
    %v2209 = vpack.c.b16 %v2049, %v2045
    %v2210 = vpack.c.b16 %v2054, %v2050
    %v2211 = vpack.c.b16 %v2055, %v2051
    %v2212 = vpack.c.b16 %v2056, %v2052
    %v2213 = vpack.c.b16 %v2057, %v2053
    %v2214 = vpack.c.b16 %v2062, %v2058
    %v2215 = vpack.c.b16 %v2063, %v2059
    %v2216 = vpack.c.b16 %v2064, %v2060
    %v2217 = vpack.c.b16 %v2065, %v2061
    %v2218 = vpack.c.b16 %v2070, %v2066
    %v2219 = vpack.c.b16 %v2071, %v2067
    %v2220 = vpack.c.b16 %v2072, %v2068
    %v2221 = vpack.c.b16 %v2073, %v2069
    %v2222 = vpack.c.b16 %v2078, %v2074
    %v2223 = vpack.c.b16 %v2079, %v2075
    %v2224 = vpack.c.b16 %v2080, %v2076
    %v2225 = vpack.c.b16 %v2081, %v2077
    %v2226 = vpack.c.b16 %v2086, %v2082
    %v2227 = vpack.c.b16 %v2087, %v2083
    %v2228 = vpack.c.b16 %v2088, %v2084
    %v2229 = vpack.c.b16 %v2089, %v2085
    %v2230 = vpack.c.b16 %v2094, %v2090
    %v2231 = vpack.c.b16 %v2095, %v2091
    %v2232 = vpack.c.b16 %v2096, %v2092
    %v2233 = vpack.c.b16 %v2097, %v2093
    %v2234 = vpack.c.b16 %v2102, %v2098
    %v2235 = vpack.c.b16 %v2103, %v2099
    %v2236 = vpack.c.b16 %v2104, %v2100
    %v2237 = vpack.c.b16 %v2105, %v2101
    %v2238 = vpack.c.b16 %v2110, %v2106
    %v2239 = vpack.c.b16 %v2111, %v2107
    %v2240 = vpack.c.b16 %v2112, %v2108
    %v2241 = vpack.c.b16 %v2113, %v2109
    %2370 = vmatprep.subr.bf16.mxu0 %v2143
    %2371 = vmatpush1.bf16.msra.mxu0 %v2142
    %2372 = vmatprep.subr.bf16.mxu0 %v2139
    %2373 = vmatpush1.bf16.msra.mxu0 %v2138
    %2374 = vmatprep.subr.bf16.mxu0 %v2135
    %2375 = vmatpush1.bf16.msra.mxu0 %v2134
    %2376 = vmatprep.subr.bf16.mxu0 %v2131
    %2377 = vmatpush1.bf16.msra.mxu0 %v2130
    %2378 = vmatprep.subr.bf16.mxu0 %v2127
    %2379 = vmatpush1.bf16.msra.mxu0 %v2126
    %2380 = vmatprep.subr.bf16.mxu0 %v2123
    %2381 = vmatpush1.bf16.msra.mxu0 %v2122
    %2382 = vmatprep.subr.bf16.mxu0 %v2119
    %2383 = vmatpush1.bf16.msra.mxu0 %v2118
    %2384 = vmatprep.subr.bf16.mxu0 %v2115
    %2385 = vmatpush1.bf16.msra.mxu0 %v2114
    %2386 = vmatprep.subr.bf16.mxu0 %v2175
    %2387 = vmatpush2.bf16.msra.mxu0 %v2174
    %2388 = vmatprep.subr.bf16.mxu0 %v2171
    %2389 = vmatpush2.bf16.msra.mxu0 %v2170
    %2390 = vmatprep.subr.bf16.mxu0 %v2167
    %2391 = vmatpush2.bf16.msra.mxu0 %v2166
    %2392 = vmatprep.subr.bf16.mxu0 %v2163
    %2393 = vmatpush2.bf16.msra.mxu0 %v2162
    %2394 = vmatprep.subr.bf16.mxu0 %v2159
    %2395 = vmatpush2.bf16.msra.mxu0 %v2158
    %2396 = vmatprep.subr.bf16.mxu0 %v2155
    %2397 = vmatpush2.bf16.msra.mxu0 %v2154
    %2398 = vmatprep.subr.bf16.mxu0 %v2151
    %2399 = vmatpush2.bf16.msra.mxu0 %v2150
    %2400 = vmatprep.subr.bf16.mxu0 %v2147
    %2401 = vmatpush2.bf16.msra.mxu0 %v2146
    %2402 = vmatprep.mubr.bf16.mxu0 %v1577
    %2403 = vmatmul.mubr.bf16.gmra.mxu0 %v1576
    %v2404 = vpop.f32.mrf.mxu0
    %v2405 = vadd.f32 %v1713, %v2404
    %v2406 = vpop.f32.mrf.mxu0
    %v2407 = vadd.f32 %v1717, %v2406
    %v2408 = vpop.f32.mrf.mxu0
    %v2409 = vpop.f32.mrf.mxu0
    %2410 = vdwg.mxu0
    %2411 = vmatprep.subr.bf16.mxu0 %v2207
    %2412 = vmatpush1.bf16.msra.mxu0 %v2206
    %2413 = vmatprep.subr.bf16.mxu0 %v2203
    %2414 = vmatpush1.bf16.msra.mxu0 %v2202
    %2415 = vmatprep.subr.bf16.mxu0 %v2199
    %2416 = vmatpush1.bf16.msra.mxu0 %v2198
    %2417 = vmatprep.subr.bf16.mxu0 %v2195
    %2418 = vmatpush1.bf16.msra.mxu0 %v2194
    %2419 = vmatprep.subr.bf16.mxu0 %v2191
    %2420 = vmatpush1.bf16.msra.mxu0 %v2190
    %2421 = vmatprep.subr.bf16.mxu0 %v2187
    %2422 = vmatpush1.bf16.msra.mxu0 %v2186
    %2423 = vmatprep.subr.bf16.mxu0 %v2183
    %2424 = vmatpush1.bf16.msra.mxu0 %v2182
    %2425 = vmatprep.subr.bf16.mxu0 %v2179
    %2426 = vmatpush1.bf16.msra.mxu0 %v2178
    %2427 = vmatprep.subr.bf16.mxu0 %v2239
    %2428 = vmatpush2.bf16.msra.mxu0 %v2238
    %2429 = vmatprep.subr.bf16.mxu0 %v2235
    %2430 = vmatpush2.bf16.msra.mxu0 %v2234
    %2431 = vmatprep.subr.bf16.mxu0 %v2231
    %2432 = vmatpush2.bf16.msra.mxu0 %v2230
    %2433 = vmatprep.subr.bf16.mxu0 %v2227
    %2434 = vmatpush2.bf16.msra.mxu0 %v2226
    %2435 = vmatprep.subr.bf16.mxu0 %v2223
    %2436 = vmatpush2.bf16.msra.mxu0 %v2222
    %2437 = vmatprep.subr.bf16.mxu0 %v2219
    %2438 = vmatpush2.bf16.msra.mxu0 %v2218
    %2439 = vmatprep.subr.bf16.mxu0 %v2215
    %2440 = vmatpush2.bf16.msra.mxu0 %v2214
    %2441 = vmatprep.subr.bf16.mxu0 %v2211
    %2442 = vmatpush2.bf16.msra.mxu0 %v2210
    %2443 = vmatprep.mubr.bf16.mxu0 %v1579
    %2444 = vmatmul.mubr.bf16.gmra.mxu0 %v1578
    %v2445 = vpop.f32.mrf.mxu0
    %v2446 = vadd.f32 %v2405, %v2445
    %v2447 = vpop.f32.mrf.mxu0
    %v2448 = vadd.f32 %v2407, %v2447
    %v2449 = vpop.f32.mrf.mxu0
    %v2450 = vpop.f32.mrf.mxu0
    %2451 = vdwg.mxu0
    %2452 = vmatprep.subr.bf16.mxu0 %v2145
    %2453 = vmatpush1.bf16.msra.mxu0 %v2144
    %2454 = vmatprep.subr.bf16.mxu0 %v2141
    %2455 = vmatpush1.bf16.msra.mxu0 %v2140
    %2456 = vmatprep.subr.bf16.mxu0 %v2137
    %2457 = vmatpush1.bf16.msra.mxu0 %v2136
    %2458 = vmatprep.subr.bf16.mxu0 %v2133
    %2459 = vmatpush1.bf16.msra.mxu0 %v2132
    %2460 = vmatprep.subr.bf16.mxu0 %v2129
    %2461 = vmatpush1.bf16.msra.mxu0 %v2128
    %2462 = vmatprep.subr.bf16.mxu0 %v2125
    %2463 = vmatpush1.bf16.msra.mxu0 %v2124
    %2464 = vmatprep.subr.bf16.mxu0 %v2121
    %2465 = vmatpush1.bf16.msra.mxu0 %v2120
    %2466 = vmatprep.subr.bf16.mxu0 %v2117
    %2467 = vmatpush1.bf16.msra.mxu0 %v2116
    %2468 = vmatprep.subr.bf16.mxu0 %v2177
    %2469 = vmatpush2.bf16.msra.mxu0 %v2176
    %2470 = vmatprep.subr.bf16.mxu0 %v2173
    %2471 = vmatpush2.bf16.msra.mxu0 %v2172
    %2472 = vmatprep.subr.bf16.mxu0 %v2169
    %2473 = vmatpush2.bf16.msra.mxu0 %v2168
    %2474 = vmatprep.subr.bf16.mxu0 %v2165
    %2475 = vmatpush2.bf16.msra.mxu0 %v2164
    %2476 = vmatprep.subr.bf16.mxu0 %v2161
    %2477 = vmatpush2.bf16.msra.mxu0 %v2160
    %2478 = vmatprep.subr.bf16.mxu0 %v2157
    %2479 = vmatpush2.bf16.msra.mxu0 %v2156
    %2480 = vmatprep.subr.bf16.mxu0 %v2153
    %2481 = vmatpush2.bf16.msra.mxu0 %v2152
    %2482 = vmatprep.subr.bf16.mxu0 %v2149
    %2483 = vmatpush2.bf16.msra.mxu0 %v2148
    %2484 = vmatprep.mubr.bf16.mxu0 %v1577
    %2485 = vmatmul.mubr.bf16.gmra.mxu0 %v1576
    %v2486 = vpop.f32.mrf.mxu0
    %v2487 = vadd.f32 %v1721, %v2486
    %v2488 = vpop.f32.mrf.mxu0
    %v2489 = vadd.f32 %v1725, %v2488
    %v2490 = vpop.f32.mrf.mxu0
    %v2491 = vpop.f32.mrf.mxu0
    %2492 = vdwg.mxu0
    %2493 = vmatprep.subr.bf16.mxu0 %v2209
    %2494 = vmatpush1.bf16.msra.mxu0 %v2208
    %2495 = vmatprep.subr.bf16.mxu0 %v2205
    %2496 = vmatpush1.bf16.msra.mxu0 %v2204
    %2497 = vmatprep.subr.bf16.mxu0 %v2201
    %2498 = vmatpush1.bf16.msra.mxu0 %v2200
    %2499 = vmatprep.subr.bf16.mxu0 %v2197
    %2500 = vmatpush1.bf16.msra.mxu0 %v2196
    %2501 = vmatprep.subr.bf16.mxu0 %v2193
    %2502 = vmatpush1.bf16.msra.mxu0 %v2192
    %2503 = vmatprep.subr.bf16.mxu0 %v2189
    %2504 = vmatpush1.bf16.msra.mxu0 %v2188
    %2505 = vmatprep.subr.bf16.mxu0 %v2185
    %2506 = vmatpush1.bf16.msra.mxu0 %v2184
    %2507 = vmatprep.subr.bf16.mxu0 %v2181
    %2508 = vmatpush1.bf16.msra.mxu0 %v2180
    %2509 = vmatprep.subr.bf16.mxu0 %v2241
    %2510 = vmatpush2.bf16.msra.mxu0 %v2240
    %2511 = vmatprep.subr.bf16.mxu0 %v2237
    %2512 = vmatpush2.bf16.msra.mxu0 %v2236
    %2513 = vmatprep.subr.bf16.mxu0 %v2233
    %2514 = vmatpush2.bf16.msra.mxu0 %v2232
    %2515 = vmatprep.subr.bf16.mxu0 %v2229
    %2516 = vmatpush2.bf16.msra.mxu0 %v2228
    %2517 = vmatprep.subr.bf16.mxu0 %v2225
    %2518 = vmatpush2.bf16.msra.mxu0 %v2224
    %2519 = vmatprep.subr.bf16.mxu0 %v2221
    %2520 = vmatpush2.bf16.msra.mxu0 %v2220
    %2521 = vmatprep.subr.bf16.mxu0 %v2217
    %2522 = vmatpush2.bf16.msra.mxu0 %v2216
    %2523 = vmatprep.subr.bf16.mxu0 %v2213
    %2524 = vmatpush2.bf16.msra.mxu0 %v2212
    %2525 = vmatprep.mubr.bf16.mxu0 %v1579
    %2526 = vmatmul.mubr.bf16.gmra.mxu0 %v1578
    %v2527 = vpop.f32.mrf.mxu0
    %v2528 = vadd.f32 %v2487, %v2527
    %v2529 = vpop.f32.mrf.mxu0
    %v2530 = vadd.f32 %v2489, %v2529
    %v2531 = vpop.f32.mrf.mxu0
    %v2532 = vpop.f32.mrf.mxu0
    %2533 = vdwg.mxu0
    %v2534 = vmax.f32 %v2446, 0.0
    %v2535 = vmax.f32 %v2448, 0.0
    %v2536 = vmax.f32 %v2528, 0.0
    %v2537 = vmax.f32 %v2530, 0.0
    %v2538 = vpack.c.bf16 %v2534, %v2534
    %v2539 = vpack.c.bf16 %v2535, %v2535
    %v2540 = vpack.c.bf16 %v2536, %v2536
    %v2541 = vpack.c.bf16 %v2537, %v2537
    %v2542 = vld [vmem:[%s5] sm:$0xf]
    %v2543 = vld [vmem:[%s5 + $0x4] sm:$0xf]
    %v2544 = vld [vmem:[%s5 + $0x8] sm:$0xf]
    %v2545 = vld [vmem:[%s5 + $0xc] sm:$0xf]
    %v2546 = vld [vmem:[%s5 + $0x10] sm:$0xf]
    %v2547 = vld [vmem:[%s5 + $0x14] sm:$0xf]
    %v2548 = vld [vmem:[%s5 + $0x18] sm:$0xf]
    %v2549 = vld [vmem:[%s5 + $0x1c] sm:$0xf]
    %v2550 = vld [vmem:[%s5 + $0x20] sm:$0xf]
    %v2551 = vld [vmem:[%s5 + $0x24] sm:$0xf]
    %v2552 = vld [vmem:[%s5 + $0x28] sm:$0xf]
    %v2553 = vld [vmem:[%s5 + $0x2c] sm:$0xf]
    %v2554 = vld [vmem:[%s5 + $0x30] sm:$0xf]
    %v2555 = vld [vmem:[%s5 + $0x34] sm:$0xf]
    %v2556 = vld [vmem:[%s5 + $0x38] sm:$0xf]
    %v2557 = vld [vmem:[%s5 + $0x3c] sm:$0xf]
    %v2558 = vld [vmem:[%s5 + $0x40] sm:$0xf]
    %v2559 = vld [vmem:[%s5 + $0x44] sm:$0xf]
    %v2560 = vld [vmem:[%s5 + $0x48] sm:$0xf]
    %v2561 = vld [vmem:[%s5 + $0x4c] sm:$0xf]
    %v2562 = vld [vmem:[%s5 + $0x50] sm:$0xf]
    %v2563 = vld [vmem:[%s5 + $0x54] sm:$0xf]
    %v2564 = vld [vmem:[%s5 + $0x58] sm:$0xf]
    %v2565 = vld [vmem:[%s5 + $0x5c] sm:$0xf]
    %v2566 = vld [vmem:[%s5 + $0x60] sm:$0xf]
    %v2567 = vld [vmem:[%s5 + $0x64] sm:$0xf]
    %v2568 = vld [vmem:[%s5 + $0x68] sm:$0xf]
    %v2569 = vld [vmem:[%s5 + $0x6c] sm:$0xf]
    %v2570 = vld [vmem:[%s5 + $0x70] sm:$0xf]
    %v2571 = vld [vmem:[%s5 + $0x74] sm:$0xf]
    %v2572 = vld [vmem:[%s5 + $0x78] sm:$0xf]
    %v2573 = vld [vmem:[%s5 + $0x7c] sm:$0xf]
    %v2574 = vld [vmem:[%s5 + $0x80] sm:$0xf]
    %v2575 = vld [vmem:[%s5 + $0x84] sm:$0xf]
    %v2576 = vld [vmem:[%s5 + $0x88] sm:$0xf]
    %v2577 = vld [vmem:[%s5 + $0x8c] sm:$0xf]
    %v2578 = vld [vmem:[%s5 + $0x90] sm:$0xf]
    %v2579 = vld [vmem:[%s5 + $0x94] sm:$0xf]
    %v2580 = vld [vmem:[%s5 + $0x98] sm:$0xf]
    %v2581 = vld [vmem:[%s5 + $0x9c] sm:$0xf]
    %v2582 = vld [vmem:[%s5 + $0xa0] sm:$0xf]
    %v2583 = vld [vmem:[%s5 + $0xa4] sm:$0xf]
    %v2584 = vld [vmem:[%s5 + $0xa8] sm:$0xf]
    %v2585 = vld [vmem:[%s5 + $0xac] sm:$0xf]
    %v2586 = vld [vmem:[%s5 + $0xb0] sm:$0xf]
    %v2587 = vld [vmem:[%s5 + $0xb4] sm:$0xf]
    %v2588 = vld [vmem:[%s5 + $0xb8] sm:$0xf]
    %v2589 = vld [vmem:[%s5 + $0xbc] sm:$0xf]
    %v2590 = vld [vmem:[%s5 + $0xc0] sm:$0xf]
    %v2591 = vld [vmem:[%s5 + $0xc4] sm:$0xf]
    %v2592 = vld [vmem:[%s5 + $0xc8] sm:$0xf]
    %v2593 = vld [vmem:[%s5 + $0xcc] sm:$0xf]
    %v2594 = vld [vmem:[%s5 + $0xd0] sm:$0xf]
    %v2595 = vld [vmem:[%s5 + $0xd4] sm:$0xf]
    %v2596 = vld [vmem:[%s5 + $0xd8] sm:$0xf]
    %v2597 = vld [vmem:[%s5 + $0xdc] sm:$0xf]
    %v2598 = vld [vmem:[%s5 + $0xe0] sm:$0xf]
    %v2599 = vld [vmem:[%s5 + $0xe4] sm:$0xf]
    %v2600 = vld [vmem:[%s5 + $0xe8] sm:$0xf]
    %v2601 = vld [vmem:[%s5 + $0xec] sm:$0xf]
    %v2602 = vld [vmem:[%s5 + $0xf0] sm:$0xf]
    %v2603 = vld [vmem:[%s5 + $0xf4] sm:$0xf]
    %v2604 = vld [vmem:[%s5 + $0xf8] sm:$0xf]
    %v2605 = vld [vmem:[%s5 + $0xfc] sm:$0xf]
    %v2606 = vld [vmem:[%s6] sm:$0x1]
    %v2608 = vlaneseq
    %v2609 = vshrl.u32 %v2608, 7
    %v2610 = vsub.s32 0, %v2609
    %v2611 = vrot.slane %v2606, %v2610
    %v2677 = vunpack.c.l.b16 %v2542
    %v2678 = vunpack.c.l.b16 %v2543
    %v2679 = vunpack.c.l.b16 %v2544
    %v2680 = vunpack.c.l.b16 %v2545
    %v2681 = vunpack.c.l.b16 %v2546
    %v2682 = vunpack.c.l.b16 %v2547
    %v2683 = vunpack.c.l.b16 %v2548
    %v2684 = vunpack.c.l.b16 %v2549
    %v2685 = vunpack.c.l.b16 %v2550
    %v2686 = vunpack.c.l.b16 %v2551
    %v2687 = vunpack.c.l.b16 %v2552
    %v2688 = vunpack.c.l.b16 %v2553
    %v2689 = vunpack.c.l.b16 %v2554
    %v2690 = vunpack.c.l.b16 %v2555
    %v2691 = vunpack.c.l.b16 %v2556
    %v2692 = vunpack.c.l.b16 %v2557
    %v2693 = vunpack.c.l.b16 %v2558
    %v2694 = vunpack.c.l.b16 %v2559
    %v2695 = vunpack.c.l.b16 %v2560
    %v2696 = vunpack.c.l.b16 %v2561
    %v2697 = vunpack.c.l.b16 %v2562
    %v2698 = vunpack.c.l.b16 %v2563
    %v2699 = vunpack.c.l.b16 %v2564
    %v2700 = vunpack.c.l.b16 %v2565
    %v2701 = vunpack.c.l.b16 %v2566
    %v2702 = vunpack.c.l.b16 %v2567
    %v2703 = vunpack.c.l.b16 %v2568
    %v2704 = vunpack.c.l.b16 %v2569
    %v2705 = vunpack.c.l.b16 %v2570
    %v2706 = vunpack.c.l.b16 %v2571
    %v2707 = vunpack.c.l.b16 %v2572
    %v2708 = vunpack.c.l.b16 %v2573
    %v2709 = vunpack.c.l.b16 %v2574
    %v2710 = vunpack.c.l.b16 %v2575
    %v2711 = vunpack.c.l.b16 %v2576
    %v2712 = vunpack.c.l.b16 %v2577
    %v2713 = vunpack.c.l.b16 %v2578
    %v2714 = vunpack.c.l.b16 %v2579
    %v2715 = vunpack.c.l.b16 %v2580
    %v2716 = vunpack.c.l.b16 %v2581
    %v2717 = vunpack.c.l.b16 %v2582
    %v2718 = vunpack.c.l.b16 %v2583
    %v2719 = vunpack.c.l.b16 %v2584
    %v2720 = vunpack.c.l.b16 %v2585
    %v2721 = vunpack.c.l.b16 %v2586
    %v2722 = vunpack.c.l.b16 %v2587
    %v2723 = vunpack.c.l.b16 %v2588
    %v2724 = vunpack.c.l.b16 %v2589
    %v2725 = vunpack.c.l.b16 %v2590
    %v2726 = vunpack.c.l.b16 %v2591
    %v2727 = vunpack.c.l.b16 %v2592
    %v2728 = vunpack.c.l.b16 %v2593
    %v2729 = vunpack.c.l.b16 %v2594
    %v2730 = vunpack.c.l.b16 %v2595
    %v2731 = vunpack.c.l.b16 %v2596
    %v2732 = vunpack.c.l.b16 %v2597
    %v2733 = vunpack.c.l.b16 %v2598
    %v2734 = vunpack.c.l.b16 %v2599
    %v2735 = vunpack.c.l.b16 %v2600
    %v2736 = vunpack.c.l.b16 %v2601
    %v2737 = vunpack.c.l.b16 %v2602
    %v2738 = vunpack.c.l.b16 %v2603
    %v2739 = vunpack.c.l.b16 %v2604
    %v2740 = vunpack.c.l.b16 %v2605
    %v2741 = vpack.c.b16 %v2678, %v2677
    %v2742 = vpack.c.b16 %v2680, %v2679
    %v2743 = vpack.c.b16 %v2682, %v2681
    %v2744 = vpack.c.b16 %v2684, %v2683
    %v2745 = vpack.c.b16 %v2686, %v2685
    %v2746 = vpack.c.b16 %v2688, %v2687
    %v2747 = vpack.c.b16 %v2690, %v2689
    %v2748 = vpack.c.b16 %v2692, %v2691
    %v2749 = vpack.c.b16 %v2694, %v2693
    %v2750 = vpack.c.b16 %v2696, %v2695
    %v2751 = vpack.c.b16 %v2698, %v2697
    %v2752 = vpack.c.b16 %v2700, %v2699
    %v2753 = vpack.c.b16 %v2702, %v2701
    %v2754 = vpack.c.b16 %v2704, %v2703
    %v2755 = vpack.c.b16 %v2706, %v2705
    %v2756 = vpack.c.b16 %v2708, %v2707
    %v2757 = vpack.c.b16 %v2710, %v2709
    %v2758 = vpack.c.b16 %v2712, %v2711
    %v2759 = vpack.c.b16 %v2714, %v2713
    %v2760 = vpack.c.b16 %v2716, %v2715
    %v2761 = vpack.c.b16 %v2718, %v2717
    %v2762 = vpack.c.b16 %v2720, %v2719
    %v2763 = vpack.c.b16 %v2722, %v2721
    %v2764 = vpack.c.b16 %v2724, %v2723
    %v2765 = vpack.c.b16 %v2726, %v2725
    %v2766 = vpack.c.b16 %v2728, %v2727
    %v2767 = vpack.c.b16 %v2730, %v2729
    %v2768 = vpack.c.b16 %v2732, %v2731
    %v2769 = vpack.c.b16 %v2734, %v2733
    %v2770 = vpack.c.b16 %v2736, %v2735
    %v2771 = vpack.c.b16 %v2738, %v2737
    %v2772 = vpack.c.b16 %v2740, %v2739
    %2805 = vmatprep.subr.bf16.mxu0 0
    %2806 = vmatpush1.bf16.msra.mxu0 %v2748
    %2807 = vmatprep.subr.bf16.mxu0 0
    %2808 = vmatpush1.bf16.msra.mxu0 %v2747
    %2809 = vmatprep.subr.bf16.mxu0 0
    %2810 = vmatpush1.bf16.msra.mxu0 %v2746
    %2811 = vmatprep.subr.bf16.mxu0 0
    %2812 = vmatpush1.bf16.msra.mxu0 %v2745
    %2813 = vmatprep.subr.bf16.mxu0 0
    %2814 = vmatpush1.bf16.msra.mxu0 %v2744
    %2815 = vmatprep.subr.bf16.mxu0 0
    %2816 = vmatpush1.bf16.msra.mxu0 %v2743
    %2817 = vmatprep.subr.bf16.mxu0 0
    %2818 = vmatpush1.bf16.msra.mxu0 %v2742
    %2819 = vmatprep.subr.bf16.mxu0 0
    %2820 = vmatpush1.bf16.msra.mxu0 %v2741
    %2821 = vmatprep.subr.bf16.mxu0 0
    %2822 = vmatpush2.bf16.msra.mxu0 %v2756
    %2823 = vmatprep.subr.bf16.mxu0 0
    %2824 = vmatpush2.bf16.msra.mxu0 %v2755
    %2825 = vmatprep.subr.bf16.mxu0 0
    %2826 = vmatpush2.bf16.msra.mxu0 %v2754
    %2827 = vmatprep.subr.bf16.mxu0 0
    %2828 = vmatpush2.bf16.msra.mxu0 %v2753
    %2829 = vmatprep.subr.bf16.mxu0 0
    %2830 = vmatpush2.bf16.msra.mxu0 %v2752
    %2831 = vmatprep.subr.bf16.mxu0 0
    %2832 = vmatpush2.bf16.msra.mxu0 %v2751
    %2833 = vmatprep.subr.bf16.mxu0 0
    %2834 = vmatpush2.bf16.msra.mxu0 %v2750
    %2835 = vmatprep.subr.bf16.mxu0 0
    %2836 = vmatpush2.bf16.msra.mxu0 %v2749
    %2837 = vmatprep.mubr.bf16.mxu0 %v2539
    %2838 = vmatmul.mubr.bf16.gmra.mxu0 %v2538
    %v2839 = vpop.f32.mrf.mxu0
    %v2840 = vadd.f32 %v2611, %v2839
    %v2841 = vpop.f32.mrf.mxu0
    %v2842 = vpop.f32.mrf.mxu0
    %v2843 = vpop.f32.mrf.mxu0
    %2844 = vdwg.mxu0
    %2845 = vmatprep.subr.bf16.mxu0 0
    %2846 = vmatpush1.bf16.msra.mxu0 %v2764
    %2847 = vmatprep.subr.bf16.mxu0 0
    %2848 = vmatpush1.bf16.msra.mxu0 %v2763
    %2849 = vmatprep.subr.bf16.mxu0 0
    %2850 = vmatpush1.bf16.msra.mxu0 %v2762
    %2851 = vmatprep.subr.bf16.mxu0 0
    %2852 = vmatpush1.bf16.msra.mxu0 %v2761
    %2853 = vmatprep.subr.bf16.mxu0 0
    %2854 = vmatpush1.bf16.msra.mxu0 %v2760
    %2855 = vmatprep.subr.bf16.mxu0 0
    %2856 = vmatpush1.bf16.msra.mxu0 %v2759
    %2857 = vmatprep.subr.bf16.mxu0 0
    %2858 = vmatpush1.bf16.msra.mxu0 %v2758
    %2859 = vmatprep.subr.bf16.mxu0 0
    %2860 = vmatpush1.bf16.msra.mxu0 %v2757
    %2861 = vmatprep.subr.bf16.mxu0 0
    %2862 = vmatpush2.bf16.msra.mxu0 %v2772
    %2863 = vmatprep.subr.bf16.mxu0 0
    %2864 = vmatpush2.bf16.msra.mxu0 %v2771
    %2865 = vmatprep.subr.bf16.mxu0 0
    %2866 = vmatpush2.bf16.msra.mxu0 %v2770
    %2867 = vmatprep.subr.bf16.mxu0 0
    %2868 = vmatpush2.bf16.msra.mxu0 %v2769
    %2869 = vmatprep.subr.bf16.mxu0 0
    %2870 = vmatpush2.bf16.msra.mxu0 %v2768
    %2871 = vmatprep.subr.bf16.mxu0 0
    %2872 = vmatpush2.bf16.msra.mxu0 %v2767
    %2873 = vmatprep.subr.bf16.mxu0 0
    %2874 = vmatpush2.bf16.msra.mxu0 %v2766
    %2875 = vmatprep.subr.bf16.mxu0 0
    %2876 = vmatpush2.bf16.msra.mxu0 %v2765
    %2877 = vmatprep.mubr.bf16.mxu0 %v2541
    %2878 = vmatmul.mubr.bf16.gmra.mxu0 %v2540
    %v2879 = vpop.f32.mrf.mxu0
    %v2880 = vadd.f32 %v2840, %v2879
    %v2881 = vpop.f32.mrf.mxu0
    %v2882 = vpop.f32.mrf.mxu0
    %v2883 = vpop.f32.mrf.mxu0
    %2884 = vdwg.mxu0
    %2885 = vst [vmem:[#allocation2] sm:$0xff] %v2880
    // Predicated region
    $region30: #{mlp_forward.1} parent=1 // pred_check
      _
    $region31: #{mlp_forward.1} parent=1 // pred_check_branch
      %2887 = sbr.rel (0) target = $region33
    $region32: #{mlp_forward.1} parent=1 // pred_region
      %s2889 = ssub.s32 128, 128
      %2890 = vsyncadd [#allocation3], %s2889
      %s2892 = sshll.u32 [#allocation2], 4
      %s2893 = int_to_ptr.vmem [resolvable:$true] %s2892
      %2895 = dma.vmem_to_hbm [thread:$0]  %s2893, 128, %s7, [#allocation3]
    $region33: #{mlp_forward.1} parent=1 // pred_fallthru
      _
    // Predicated region
    $region34: #{mlp_forward.1} parent=1 // pred_check
      _
    $region35: #{mlp_forward.1} parent=1 // pred_check_branch
      %2897 = sbr.rel (0) target = $region37
    $region36: #{mlp_forward.1} parent=1 // pred_region
      %2898 = dma.done [#allocation3], 128
    $region37: #{mlp_forward.1} parent=1 // pred_fallthru
      _
    %2899 = vsyncpa [#allocation3], 1

</llo_original>
